<compile_context>
chip_gen: v6e
topology: v6e:2x2x1
jax: 0.10.0
libtpu: 0.0.40
codegen_flags: <defaults>
</compile_context>

<pallas_src>
import jax
import jax.numpy as jnp
from jax.experimental import pallas as pl
from jax.experimental.pallas import tpu as pltpu  # noqa: F401  (kept for production variants)


def sdpa_fused_kernel(q_ref, k_ref, v_ref, inv_ref, o_ref):
    q = q_ref[...]            # (BH, Sq, D)
    k = k_ref[...]            # (BH, Sk, D)
    v = v_ref[...]            # (BH, Sk, D)
    inv = inv_ref[...]        # (1, Sk)   -- Sk on the lane axis

    # qk = query @ key^T, batched over the fused B*H axis, f32 accumulation on the MXU.
    s = jnp.einsum("bqd,bkd->bqk", q, k,
                   preferred_element_type=jnp.float32)           # (BH, Sq, Sk)

    # scaled_qk = qk / inv_scale_factor: one exact reciprocal of the (1, Sk) vector, then a
    # lane-aligned broadcast multiply.  (Flash-tiled version: fold `r` into the K tile.)
    r = 1.0 / inv                                                # (1, Sk)
    scaled = s * r[None, :, :]                                   # (BH, Sq, Sk)

    # Numerically stable softmax with the normalisation deferred past the PV matmul.
    m = jnp.max(scaled, axis=-1, keepdims=True)                  # (BH, Sq, 1)
    e = jnp.exp(scaled - m)                                      # (BH, Sq, Sk)
    l = jnp.sum(e, axis=-1, keepdims=True)                       # (BH, Sq, 1)

    # dropout with p = 0 -> identity.
    # output = softmax(scaled) @ value == (e @ value) / l ; normalise the small (BH, Sq, D)
    # tensor instead of the (BH, Sq, Sk) probabilities.
    o = jnp.einsum("bqk,bkd->bqd", e.astype(v.dtype), v,
                   preferred_element_type=jnp.float32)           # (BH, Sq, D)
    o_ref[...] = (o / l).astype(o_ref.dtype)


def sdpa_pallas(query, key, value, inv_scale_factor):
    B, H, Sq, D = query.shape
    Bk, Hk, Sk, Dk = key.shape
    assert (B, H, D) == (Bk, Hk, Dk)
    assert value.shape == key.shape
    assert inv_scale_factor.shape == (1, 1, 1, Sk)
    BH = B * H

    # Free (metadata-only) reshapes: fold (B, H) so one kernel invocation handles every head.
    q3 = query.reshape(BH, Sq, D)
    k3 = key.reshape(BH, Sk, D)
    v3 = value.reshape(BH, Sk, D)
    inv2 = inv_scale_factor.reshape(1, Sk)

    out3 = pl.pallas_call(
        sdpa_fused_kernel,
        out_shape=jax.ShapeDtypeStruct((BH, Sq, D), query.dtype),
        # Single fused step: the whole problem (~20 KB) is resident in VMEM, so per-step
        # grid overhead is paid exactly once.
        grid=(1,),
        in_specs=[
            pl.BlockSpec((BH, Sq, D), lambda i: (0, 0, 0)),
            pl.BlockSpec((BH, Sk, D), lambda i: (0, 0, 0)),
            pl.BlockSpec((BH, Sk, D), lambda i: (0, 0, 0)),
            pl.BlockSpec((1, Sk), lambda i: (0, 0)),
        ],
        out_specs=pl.BlockSpec((BH, Sq, D), lambda i: (0, 0, 0)),
    )(q3, k3, v3, inv2)

    return out3.reshape(B, H, Sq, D)


def sdpa_reference(query, key, value, inv_scale_factor):
    qk = jnp.einsum("bhqd,bhkd->bhqk", query, key)
    scaled = qk / inv_scale_factor
    p = jax.nn.softmax(scaled, axis=-1)
    # dropout(p=0) -> identity
    return jnp.einsum("bhqk,bhkd->bhqd", p, value)


if __name__ == "__main__":
    # Small shapes consistent with the module's forward semantics
    # (query (B,H,Sq,D), key/value (B,H,Sk,D), inv_scale_factor (1,1,1,Sk)).
    B, H, Sq, Sk, D = 2, 4, 16, 20, 8
    k0, k1, k2, k3 = jax.random.split(jax.random.PRNGKey(0), 4)

    # Modest logit magnitudes and a divisor bounded away from zero keep the comparison
    # insensitive to matmul-precision differences while exercising the exact op sequence
    # of the PyTorch module.
    query = 0.5 * jax.random.normal(k0, (B, H, Sq, D), dtype=jnp.float32)
    key = 0.5 * jax.random.normal(k1, (B, H, Sk, D), dtype=jnp.float32)
    value = jax.random.normal(k2, (B, H, Sk, D), dtype=jnp.float32)
    inv_scale_factor = jnp.abs(
        jax.random.normal(k3, (1, 1, 1, Sk), dtype=jnp.float32)) + 2.0

    out = jax.block_until_ready(sdpa_pallas(query, key, value, inv_scale_factor))
    ref = sdpa_reference(query, key, value, inv_scale_factor)

    assert out.shape == (B, H, Sq, D)
    assert bool(jnp.isfinite(out).all())
    # Tolerance covers MXU-full-f32 (kernel) vs default-precision (reference) matmuls only;
    # the kernel itself no longer uses any approximate reciprocals.
    assert jnp.allclose(out, ref, atol=1e-2, rtol=1e-2), float(jnp.max(jnp.abs(out - ref)))
    print("KERNEL_OK")
</pallas_src>

<mosaic_0001>
module attributes {stable_mosaic.version = 11 : i64} {
  func.func @sdpa_fused_kernel(%arg0: i32, %arg1: memref<8x16x8xf32, #tpu.memory_space<vmem>>, %arg2: memref<8x20x8xf32, #tpu.memory_space<vmem>>, %arg3: memref<8x20x8xf32, #tpu.memory_space<vmem>>, %arg4: memref<1x20xf32, #tpu.memory_space<vmem>>, %arg5: memref<8x16x8xf32, #tpu.memory_space<vmem>>) attributes {dimension_semantics = [#tpu.dimension_semantics<arbitrary>], iteration_bounds = array<i64: 1>, scalar_prefetch = 0 : i64, scratch_operands = 0 : i64, tpu.core_type = #tpu.core_type<tc>, window_params = [{pipeline_mode = #tpu.pipeline_mode<synchronous>, transform_indices = @transform_0, window_bounds = array<i64: 8, 16, 8>}, {pipeline_mode = #tpu.pipeline_mode<synchronous>, transform_indices = @transform_1, window_bounds = array<i64: 8, 20, 8>}, {pipeline_mode = #tpu.pipeline_mode<synchronous>, transform_indices = @transform_2, window_bounds = array<i64: 8, 20, 8>}, {pipeline_mode = #tpu.pipeline_mode<synchronous>, transform_indices = @transform_3, window_bounds = array<i64: 1, 20>}, {pipeline_mode = #tpu.pipeline_mode<synchronous>, transform_indices = @transform_4, window_bounds = array<i64: 8, 16, 8>}]} {
    %c0 = arith.constant 0 : index
    %c0_0 = arith.constant 0 : index
    %c0_1 = arith.constant 0 : index
    %0 = vector.load %arg1[%c0, %c0_0, %c0_1] : memref<8x16x8xf32, #tpu.memory_space<vmem>>, vector<8x16x8xf32>
    %c0_2 = arith.constant 0 : index
    %c0_3 = arith.constant 0 : index
    %c0_4 = arith.constant 0 : index
    %1 = vector.load %arg2[%c0_2, %c0_3, %c0_4] : memref<8x20x8xf32, #tpu.memory_space<vmem>>, vector<8x20x8xf32>
    %c0_5 = arith.constant 0 : index
    %c0_6 = arith.constant 0 : index
    %c0_7 = arith.constant 0 : index
    %2 = vector.load %arg3[%c0_5, %c0_6, %c0_7] : memref<8x20x8xf32, #tpu.memory_space<vmem>>, vector<8x20x8xf32>
    %c0_8 = arith.constant 0 : index
    %c0_9 = arith.constant 0 : index
    %3 = vector.load %arg4[%c0_8, %c0_9] : memref<1x20xf32, #tpu.memory_space<vmem>>, vector<1x20xf32>
    "tpu.trace_start"() <{level = 10 : i32, message = "bqd,bkd->bqk"}> : () -> ()
    %cst = arith.constant dense<0.000000e+00> : vector<8x16x20xf32>
    %4 = tpu.matmul %0, %1, %cst {dimension_numbers = #tpu.dot_dimension_numbers<[2], [2], [1], [1], [0, 0, 0, 1, 1, 1], [0], [0]>} : vector<8x16x8xf32>, vector<8x20x8xf32>, vector<8x16x20xf32> -> vector<8x16x20xf32>
    "tpu.trace_stop"() : () -> ()
    %cst_10 = arith.constant 1.000000e+00 : f32
    %5 = vector.broadcast %cst_10 : f32 to vector<1x20xf32>
    %6 = arith.divf %5, %3 : vector<1x20xf32>
    %7 = vector.shape_cast %6 : vector<1x20xf32> to vector<1x1x20xf32>
    %8 = vector.broadcast %7 : vector<1x1x20xf32> to vector<8x16x20xf32>
    %9 = arith.mulf %4, %8 : vector<8x16x20xf32>
    %cst_11 = arith.constant dense<0xFF800000> : vector<8x16xf32>
    %10 = vector.multi_reduction <maximumf>, %9, %cst_11 [2] : vector<8x16x20xf32> to vector<8x16xf32>
    %11 = vector.shape_cast %10 : vector<8x16xf32> to vector<8x16x1xf32>
    %12 = vector.broadcast %11 : vector<8x16x1xf32> to vector<8x16x20xf32>
    %13 = arith.subf %9, %12 : vector<8x16x20xf32>
    %14 = math.exp %13 : vector<8x16x20xf32>
    %cst_12 = arith.constant dense<0.000000e+00> : vector<8x16xf32>
    %15 = vector.multi_reduction <add>, %14, %cst_12 [2] : vector<8x16x20xf32> to vector<8x16xf32>
    %16 = vector.shape_cast %15 : vector<8x16xf32> to vector<8x16x1xf32>
    "tpu.trace_start"() <{level = 10 : i32, message = "bqk,bkd->bqd"}> : () -> ()
    %cst_13 = arith.constant dense<0.000000e+00> : vector<8x16x8xf32>
    %17 = tpu.matmul %14, %2, %cst_13 {dimension_numbers = #tpu.dot_dimension_numbers<[2], [1], [1], [2], [0, 0, 0, 1, 1, 2], [0], [0]>} : vector<8x16x20xf32>, vector<8x20x8xf32>, vector<8x16x8xf32> -> vector<8x16x8xf32>
    "tpu.trace_stop"() : () -> ()
    %18 = vector.broadcast %16 : vector<8x16x1xf32> to vector<8x16x8xf32>
    %19 = arith.divf %17, %18 : vector<8x16x8xf32>
    %c0_14 = arith.constant 0 : index
    %c0_15 = arith.constant 0 : index
    %c0_16 = arith.constant 0 : index
    %20 = vector.load %arg5[%c0_14, %c0_15, %c0_16] : memref<8x16x8xf32, #tpu.memory_space<vmem>>, vector<8x16x8xf32>
    tpu.vector_store %arg5[%c0_14, %c0_15, %c0_16], %19 {strides = array<i32>} : memref<8x16x8xf32, #tpu.memory_space<vmem>>, vector<8x16x8xf32>,
    return
  }
  func.func @transform_0(%arg0: i32) -> (i32, i32, i32) {
    %c0_i32 = arith.constant 0 : i32
    %c0_i32_0 = arith.constant 0 : i32
    %c0_i32_1 = arith.constant 0 : i32
    %c0_i32_2 = arith.constant 0 : i32
    return %c0_i32, %c0_i32_0, %c0_i32_1 : i32, i32, i32
  }
  func.func @transform_1(%arg0: i32) -> (i32, i32, i32) {
    %c0_i32 = arith.constant 0 : i32
    %c0_i32_0 = arith.constant 0 : i32
    %c0_i32_1 = arith.constant 0 : i32
    %c0_i32_2 = arith.constant 0 : i32
    return %c0_i32, %c0_i32_0, %c0_i32_1 : i32, i32, i32
  }
  func.func @transform_2(%arg0: i32) -> (i32, i32, i32) {
    %c0_i32 = arith.constant 0 : i32
    %c0_i32_0 = arith.constant 0 : i32
    %c0_i32_1 = arith.constant 0 : i32
    %c0_i32_2 = arith.constant 0 : i32
    return %c0_i32, %c0_i32_0, %c0_i32_1 : i32, i32, i32
  }
  func.func @transform_3(%arg0: i32) -> (i32, i32) {
    %c0_i32 = arith.constant 0 : i32
    %c0_i32_0 = arith.constant 0 : i32
    %c0_i32_1 = arith.constant 0 : i32
    return %c0_i32, %c0_i32_0 : i32, i32
  }
  func.func @transform_4(%arg0: i32) -> (i32, i32, i32) {
    %c0_i32 = arith.constant 0 : i32
    %c0_i32_0 = arith.constant 0 : i32
    %c0_i32_1 = arith.constant 0 : i32
    %c0_i32_2 = arith.constant 0 : i32
    return %c0_i32, %c0_i32_0, %c0_i32_1 : i32, i32, i32
  }
}

</mosaic_0001>

<llo_original>
// kernel: tpu_custom_call.1
$region0: #{tpu_custom_call.1}
  #allocation0 [shape = 'u32[]', space=smem, size = 0x4, offset = 0x4, fixed_abs, tag = 'smem constant byte address 0x4 - core index']
  #allocation1 [shape = 'u32[144,128]{1,0:T(1,128)}', space=vmem, size = 0x12000, scoped, tag = 'internal scratch']
  %s0 = inlined_call_operand.vmem [shape: f32[8,16,8], index: 0, kind: input, shape index: {}]
  %s1 = inlined_call_operand.vmem [shape: f32[8,20,8], index: 1, kind: input, shape index: {}]
  %s2 = inlined_call_operand.vmem [shape: f32[8,20,8], index: 2, kind: input, shape index: {}]
  %s3 = inlined_call_operand.vmem [shape: f32[1,20], index: 3, kind: input, shape index: {}]
  %s4 = inlined_call_operand.vmem [shape: f32[8,16,8], index: 4, kind: output, shape index: {}]
  %s5 = sld [smem:[#allocation0]]
  $region26: #{tpu_custom_call.1} parent=0
    _
  %s7 = ssub.s32 1, %s5
  %s8 = scalar_select 0, %s7, %s5
  // Predicated region
  $region2: #{tpu_custom_call.1} parent=0 // pred_check
    _
  $region3: #{tpu_custom_call.1} parent=0 // pred_check_branch
    %10 = sbr.rel (0) target = $region5
  $region4: #{tpu_custom_call.1} parent=0 // pred_region
    _
  $region5: #{tpu_custom_call.1} parent=0 // pred_fallthru
    _
  // Predicated region
  $region6: #{tpu_custom_call.1} parent=0 // pred_check
    _
  $region7: #{tpu_custom_call.1} parent=0 // pred_check_branch
    %12 = sbr.rel (0) target = $region9
  $region8: #{tpu_custom_call.1} parent=0 // pred_region
    _
  $region9: #{tpu_custom_call.1} parent=0 // pred_fallthru
    _
  // Predicated region
  $region10: #{tpu_custom_call.1} parent=0 // pred_check
    _
  $region11: #{tpu_custom_call.1} parent=0 // pred_check_branch
    %14 = sbr.rel (0) target = $region13
  $region12: #{tpu_custom_call.1} parent=0 // pred_region
    _
  $region13: #{tpu_custom_call.1} parent=0 // pred_fallthru
    _
  // Predicated region
  $region14: #{tpu_custom_call.1} parent=0 // pred_check
    _
  $region15: #{tpu_custom_call.1} parent=0 // pred_check_branch
    %16 = sbr.rel (0) target = $region17
  $region16: #{tpu_custom_call.1} parent=0 // pred_region
    _
  $region17: #{tpu_custom_call.1} parent=0 // pred_fallthru
    _
  %v17 = vld [vmem:[%s0] sm:$0xff]
  %v18 = vld [vmem:[%s0 + $0x8] sm:$0xff]
  %v19 = vld [vmem:[%s0 + $0x10] sm:$0xff]
  %v20 = vld [vmem:[%s0 + $0x18] sm:$0xff]
  %v21 = vld [vmem:[%s0 + $0x20] sm:$0xff]
  %v22 = vld [vmem:[%s0 + $0x28] sm:$0xff]
  %v23 = vld [vmem:[%s0 + $0x30] sm:$0xff]
  %v24 = vld [vmem:[%s0 + $0x38] sm:$0xff]
  %v25 = vld [vmem:[%s0 + $0x40] sm:$0xff]
  %v26 = vld [vmem:[%s0 + $0x48] sm:$0xff]
  %v27 = vld [vmem:[%s0 + $0x50] sm:$0xff]
  %v28 = vld [vmem:[%s0 + $0x58] sm:$0xff]
  %v29 = vld [vmem:[%s0 + $0x60] sm:$0xff]
  %v30 = vld [vmem:[%s0 + $0x68] sm:$0xff]
  %v31 = vld [vmem:[%s0 + $0x70] sm:$0xff]
  %v32 = vld [vmem:[%s0 + $0x78] sm:$0xff]
  %v33 = vld [vmem:[%s1] sm:$0xff]
  %v34 = vld [vmem:[%s1 + $0x8] sm:$0xff]
  %v35 = vld [vmem:[%s1 + $0x10] sm:$0xf]
  %v36 = vld [vmem:[%s1 + $0x18] sm:$0xff]
  %v37 = vld [vmem:[%s1 + $0x20] sm:$0xff]
  %v38 = vld [vmem:[%s1 + $0x28] sm:$0xf]
  %v39 = vld [vmem:[%s1 + $0x30] sm:$0xff]
  %v40 = vld [vmem:[%s1 + $0x38] sm:$0xff]
  %v41 = vld [vmem:[%s1 + $0x40] sm:$0xf]
  %v42 = vld [vmem:[%s1 + $0x48] sm:$0xff]
  %v43 = vld [vmem:[%s1 + $0x50] sm:$0xff]
  %v44 = vld [vmem:[%s1 + $0x58] sm:$0xf]
  %v45 = vld [vmem:[%s1 + $0x60] sm:$0xff]
  %v46 = vld [vmem:[%s1 + $0x68] sm:$0xff]
  %v47 = vld [vmem:[%s1 + $0x70] sm:$0xf]
  %v48 = vld [vmem:[%s1 + $0x78] sm:$0xff]
  %v49 = vld [vmem:[%s1 + $0x80] sm:$0xff]
  %v50 = vld [vmem:[%s1 + $0x88] sm:$0xf]
  %v51 = vld [vmem:[%s1 + $0x90] sm:$0xff]
  %v52 = vld [vmem:[%s1 + $0x98] sm:$0xff]
  %v53 = vld [vmem:[%s1 + $0xa0] sm:$0xf]
  %v54 = vld [vmem:[%s1 + $0xa8] sm:$0xff]
  %v55 = vld [vmem:[%s1 + $0xb0] sm:$0xff]
  %v56 = vld [vmem:[%s1 + $0xb8] sm:$0xf]
  %v57 = vld [vmem:[%s2] sm:$0xff]
  %v58 = vld [vmem:[%s2 + $0x8] sm:$0xff]
  %v59 = vld [vmem:[%s2 + $0x10] sm:$0xf]
  %v60 = vld [vmem:[%s2 + $0x18] sm:$0xff]
  %v61 = vld [vmem:[%s2 + $0x20] sm:$0xff]
  %v62 = vld [vmem:[%s2 + $0x28] sm:$0xf]
  %v63 = vld [vmem:[%s2 + $0x30] sm:$0xff]
  %v64 = vld [vmem:[%s2 + $0x38] sm:$0xff]
  %v65 = vld [vmem:[%s2 + $0x40] sm:$0xf]
  %v66 = vld [vmem:[%s2 + $0x48] sm:$0xff]
  %v67 = vld [vmem:[%s2 + $0x50] sm:$0xff]
  %v68 = vld [vmem:[%s2 + $0x58] sm:$0xf]
  %v69 = vld [vmem:[%s2 + $0x60] sm:$0xff]
  %v70 = vld [vmem:[%s2 + $0x68] sm:$0xff]
  %v71 = vld [vmem:[%s2 + $0x70] sm:$0xf]
  %v72 = vld [vmem:[%s2 + $0x78] sm:$0xff]
  %v73 = vld [vmem:[%s2 + $0x80] sm:$0xff]
  %v74 = vld [vmem:[%s2 + $0x88] sm:$0xf]
  %v75 = vld [vmem:[%s2 + $0x90] sm:$0xff]
  %v76 = vld [vmem:[%s2 + $0x98] sm:$0xff]
  %v77 = vld [vmem:[%s2 + $0xa0] sm:$0xf]
  %v78 = vld [vmem:[%s2 + $0xa8] sm:$0xff]
  %v79 = vld [vmem:[%s2 + $0xb0] sm:$0xff]
  %v80 = vld [vmem:[%s2 + $0xb8] sm:$0xf]
  %v81 = vld [vmem:[%s3] sm:$0x1]
  %vm82 = vcmask 64512
  %v84 = vsel %vm82, %v17, 0
  %v87 = vsel %vm82, %v18, 0
  %v90 = vsel %vm82, %v33, 0
  %v93 = vsel %vm82, %v34, 0
  %v96 = vsel %vm82, %v35, 0
  %98 = vmatprep.subr.mxu0 0.0
  %99 = vmatpush1.xpose.msra.mxu0 0.0
  %100 = vmatprep.subr.mxu0 0.0
  %101 = vmatpush1.xpose.msra.mxu0 0.0
  %102 = vmatprep.subr.mxu0 0.0
  %103 = vmatpush1.xpose.msra.mxu0 0.0
  %104 = vmatprep.subr.mxu0 0.0
  %105 = vmatpush1.xpose.msra.mxu0 0.0
  %106 = vmatprep.subr.mxu0 0.0
  %107 = vmatpush1.xpose.msra.mxu0 0.0
  %108 = vmatprep.subr.mxu0 0.0
  %109 = vmatpush1.xpose.msra.mxu0 0.0
  %110 = vmatprep.subr.mxu0 0.0
  %111 = vmatpush1.xpose.msra.mxu0 0.0
  %112 = vmatprep.subr.mxu0 0.0
  %113 = vmatpush1.xpose.msra.mxu0 0.0
  %114 = vmatprep.subr.mxu0 0.0
  %115 = vmatpush1.xpose.msra.mxu0 0.0
  %116 = vmatprep.subr.mxu0 0.0
  %117 = vmatpush1.xpose.msra.mxu0 0.0
  %118 = vmatprep.subr.mxu0 0.0
  %119 = vmatpush1.xpose.msra.mxu0 0.0
  %120 = vmatprep.subr.mxu0 0.0
  %121 = vmatpush1.xpose.msra.mxu0 0.0
  %122 = vmatprep.subr.mxu0 0.0
  %123 = vmatpush1.xpose.msra.mxu0 0.0
  %124 = vmatprep.subr.mxu0 0.0
  %125 = vmatpush1.xpose.msra.mxu0 %v96
  %126 = vmatprep.subr.mxu0 0.0
  %127 = vmatpush1.xpose.msra.mxu0 %v93
  %128 = vmatprep.subr.mxu0 0.0
  %129 = vmatpush1.xpose.msra.mxu0 %v90
  %130 = vmatprep.subr.mxu0 0.0
  %131 = vmatpush2.xpose.msra.mxu0 0.0
  %132 = vmatprep.subr.mxu0 0.0
  %133 = vmatpush2.xpose.msra.mxu0 0.0
  %134 = vmatprep.subr.mxu0 0.0
  %135 = vmatpush2.xpose.msra.mxu0 0.0
  %136 = vmatprep.subr.mxu0 0.0
  %137 = vmatpush2.xpose.msra.mxu0 0.0
  %138 = vmatprep.subr.mxu0 0.0
  %139 = vmatpush2.xpose.msra.mxu0 0.0
  %140 = vmatprep.subr.mxu0 0.0
  %141 = vmatpush2.xpose.msra.mxu0 0.0
  %142 = vmatprep.subr.mxu0 0.0
  %143 = vmatpush2.xpose.msra.mxu0 0.0
  %144 = vmatprep.subr.mxu0 0.0
  %145 = vmatpush2.xpose.msra.mxu0 0.0
  %146 = vmatprep.subr.mxu0 0.0
  %147 = vmatpush2.xpose.msra.mxu0 0.0
  %148 = vmatprep.subr.mxu0 0.0
  %149 = vmatpush2.xpose.msra.mxu0 0.0
  %150 = vmatprep.subr.mxu0 0.0
  %151 = vmatpush2.xpose.msra.mxu0 0.0
  %152 = vmatprep.subr.mxu0 0.0
  %153 = vmatpush2.xpose.msra.mxu0 0.0
  %154 = vmatprep.subr.mxu0 0.0
  %155 = vmatpush2.xpose.msra.mxu0 0.0
  %156 = vmatprep.subr.mxu0 0.0
  %157 = vmatpush2.xpose.msra.mxu0 0.0
  %158 = vmatprep.subr.mxu0 0.0
  %159 = vmatpush2.xpose.msra.mxu0 0.0
  %160 = vmatprep.subr.mxu0 0.0
  %161 = vmatpush2.xpose.msra.mxu0 0.0
  %162 = vmatprep.mubr.f32.mxu0 0.0
  %163 = vmatmul.mubr.f32.gmra.mxu0 %v84
  %v164 = vpop.f32.mrf.mxu0
  %v165 = vadd.f32 0.0, %v164
  %v166 = vpop.f32.mrf.mxu0
  %167 = vmatprep.mubr.f32.mxu0 0.0
  %168 = vmatmul.mubr.f32.gmra.mxu0 %v87
  %v169 = vpop.f32.mrf.mxu0
  %v170 = vadd.f32 0.0, %v169
  %v171 = vpop.f32.mrf.mxu0
  %172 = vdwg.mxu0
  %v174 = vsel %vm82, %v19, 0
  %v177 = vsel %vm82, %v20, 0
  %v180 = vsel %vm82, %v36, 0
  %v183 = vsel %vm82, %v37, 0
  %v186 = vsel %vm82, %v38, 0
  %188 = vmatprep.subr.mxu0 0.0
  %189 = vmatpush1.xpose.msra.mxu0 0.0
  %190 = vmatprep.subr.mxu0 0.0
  %191 = vmatpush1.xpose.msra.mxu0 0.0
  %192 = vmatprep.subr.mxu0 0.0
  %193 = vmatpush1.xpose.msra.mxu0 0.0
  %194 = vmatprep.subr.mxu0 0.0
  %195 = vmatpush1.xpose.msra.mxu0 0.0
  %196 = vmatprep.subr.mxu0 0.0
  %197 = vmatpush1.xpose.msra.mxu0 0.0
  %198 = vmatprep.subr.mxu0 0.0
  %199 = vmatpush1.xpose.msra.mxu0 0.0
  %200 = vmatprep.subr.mxu0 0.0
  %201 = vmatpush1.xpose.msra.mxu0 0.0
  %202 = vmatprep.subr.mxu0 0.0
  %203 = vmatpush1.xpose.msra.mxu0 0.0
  %204 = vmatprep.subr.mxu0 0.0
  %205 = vmatpush1.xpose.msra.mxu0 0.0
  %206 = vmatprep.subr.mxu0 0.0
  %207 = vmatpush1.xpose.msra.mxu0 0.0
  %208 = vmatprep.subr.mxu0 0.0
  %209 = vmatpush1.xpose.msra.mxu0 0.0
  %210 = vmatprep.subr.mxu0 0.0
  %211 = vmatpush1.xpose.msra.mxu0 0.0
  %212 = vmatprep.subr.mxu0 0.0
  %213 = vmatpush1.xpose.msra.mxu0 0.0
  %214 = vmatprep.subr.mxu0 0.0
  %215 = vmatpush1.xpose.msra.mxu0 %v186
  %216 = vmatprep.subr.mxu0 0.0
  %217 = vmatpush1.xpose.msra.mxu0 %v183
  %218 = vmatprep.subr.mxu0 0.0
  %219 = vmatpush1.xpose.msra.mxu0 %v180
  %220 = vmatprep.subr.mxu0 0.0
  %221 = vmatpush2.xpose.msra.mxu0 0.0
  %222 = vmatprep.subr.mxu0 0.0
  %223 = vmatpush2.xpose.msra.mxu0 0.0
  %224 = vmatprep.subr.mxu0 0.0
  %225 = vmatpush2.xpose.msra.mxu0 0.0
  %226 = vmatprep.subr.mxu0 0.0
  %227 = vmatpush2.xpose.msra.mxu0 0.0
  %228 = vmatprep.subr.mxu0 0.0
  %229 = vmatpush2.xpose.msra.mxu0 0.0
  %230 = vmatprep.subr.mxu0 0.0
  %231 = vmatpush2.xpose.msra.mxu0 0.0
  %232 = vmatprep.subr.mxu0 0.0
  %233 = vmatpush2.xpose.msra.mxu0 0.0
  %234 = vmatprep.subr.mxu0 0.0
  %235 = vmatpush2.xpose.msra.mxu0 0.0
  %236 = vmatprep.subr.mxu0 0.0
  %237 = vmatpush2.xpose.msra.mxu0 0.0
  %238 = vmatprep.subr.mxu0 0.0
  %239 = vmatpush2.xpose.msra.mxu0 0.0
  %240 = vmatprep.subr.mxu0 0.0
  %241 = vmatpush2.xpose.msra.mxu0 0.0
  %242 = vmatprep.subr.mxu0 0.0
  %243 = vmatpush2.xpose.msra.mxu0 0.0
  %244 = vmatprep.subr.mxu0 0.0
  %245 = vmatpush2.xpose.msra.mxu0 0.0
  %246 = vmatprep.subr.mxu0 0.0
  %247 = vmatpush2.xpose.msra.mxu0 0.0
  %248 = vmatprep.subr.mxu0 0.0
  %249 = vmatpush2.xpose.msra.mxu0 0.0
  %250 = vmatprep.subr.mxu0 0.0
  %251 = vmatpush2.xpose.msra.mxu0 0.0
  %252 = vmatprep.mubr.f32.mxu0 0.0
  %253 = vmatmul.mubr.f32.gmra.mxu0 %v174
  %v254 = vpop.f32.mrf.mxu0
  %v255 = vadd.f32 0.0, %v254
  %v256 = vpop.f32.mrf.mxu0
  %257 = vmatprep.mubr.f32.mxu0 0.0
  %258 = vmatmul.mubr.f32.gmra.mxu0 %v177
  %v259 = vpop.f32.mrf.mxu0
  %v260 = vadd.f32 0.0, %v259
  %v261 = vpop.f32.mrf.mxu0
  %262 = vdwg.mxu0
  %v264 = vsel %vm82, %v21, 0
  %v267 = vsel %vm82, %v22, 0
  %v270 = vsel %vm82, %v39, 0
  %v273 = vsel %vm82, %v40, 0
  %v276 = vsel %vm82, %v41, 0
  %278 = vmatprep.subr.mxu0 0.0
  %279 = vmatpush1.xpose.msra.mxu0 0.0
  %280 = vmatprep.subr.mxu0 0.0
  %281 = vmatpush1.xpose.msra.mxu0 0.0
  %282 = vmatprep.subr.mxu0 0.0
  %283 = vmatpush1.xpose.msra.mxu0 0.0
  %284 = vmatprep.subr.mxu0 0.0
  %285 = vmatpush1.xpose.msra.mxu0 0.0
  %286 = vmatprep.subr.mxu0 0.0
  %287 = vmatpush1.xpose.msra.mxu0 0.0
  %288 = vmatprep.subr.mxu0 0.0
  %289 = vmatpush1.xpose.msra.mxu0 0.0
  %290 = vmatprep.subr.mxu0 0.0
  %291 = vmatpush1.xpose.msra.mxu0 0.0
  %292 = vmatprep.subr.mxu0 0.0
  %293 = vmatpush1.xpose.msra.mxu0 0.0
  %294 = vmatprep.subr.mxu0 0.0
  %295 = vmatpush1.xpose.msra.mxu0 0.0
  %296 = vmatprep.subr.mxu0 0.0
  %297 = vmatpush1.xpose.msra.mxu0 0.0
  %298 = vmatprep.subr.mxu0 0.0
  %299 = vmatpush1.xpose.msra.mxu0 0.0
  %300 = vmatprep.subr.mxu0 0.0
  %301 = vmatpush1.xpose.msra.mxu0 0.0
  %302 = vmatprep.subr.mxu0 0.0
  %303 = vmatpush1.xpose.msra.mxu0 0.0
  %304 = vmatprep.subr.mxu0 0.0
  %305 = vmatpush1.xpose.msra.mxu0 %v276
  %306 = vmatprep.subr.mxu0 0.0
  %307 = vmatpush1.xpose.msra.mxu0 %v273
  %308 = vmatprep.subr.mxu0 0.0
  %309 = vmatpush1.xpose.msra.mxu0 %v270
  %310 = vmatprep.subr.mxu0 0.0
  %311 = vmatpush2.xpose.msra.mxu0 0.0
  %312 = vmatprep.subr.mxu0 0.0
  %313 = vmatpush2.xpose.msra.mxu0 0.0
  %314 = vmatprep.subr.mxu0 0.0
  %315 = vmatpush2.xpose.msra.mxu0 0.0
  %316 = vmatprep.subr.mxu0 0.0
  %317 = vmatpush2.xpose.msra.mxu0 0.0
  %318 = vmatprep.subr.mxu0 0.0
  %319 = vmatpush2.xpose.msra.mxu0 0.0
  %320 = vmatprep.subr.mxu0 0.0
  %321 = vmatpush2.xpose.msra.mxu0 0.0
  %322 = vmatprep.subr.mxu0 0.0
  %323 = vmatpush2.xpose.msra.mxu0 0.0
  %324 = vmatprep.subr.mxu0 0.0
  %325 = vmatpush2.xpose.msra.mxu0 0.0
  %326 = vmatprep.subr.mxu0 0.0
  %327 = vmatpush2.xpose.msra.mxu0 0.0
  %328 = vmatprep.subr.mxu0 0.0
  %329 = vmatpush2.xpose.msra.mxu0 0.0
  %330 = vmatprep.subr.mxu0 0.0
  %331 = vmatpush2.xpose.msra.mxu0 0.0
  %332 = vmatprep.subr.mxu0 0.0
  %333 = vmatpush2.xpose.msra.mxu0 0.0
  %334 = vmatprep.subr.mxu0 0.0
  %335 = vmatpush2.xpose.msra.mxu0 0.0
  %336 = vmatprep.subr.mxu0 0.0
  %337 = vmatpush2.xpose.msra.mxu0 0.0
  %338 = vmatprep.subr.mxu0 0.0
  %339 = vmatpush2.xpose.msra.mxu0 0.0
  %340 = vmatprep.subr.mxu0 0.0
  %341 = vmatpush2.xpose.msra.mxu0 0.0
  %342 = vmatprep.mubr.f32.mxu0 0.0
  %343 = vmatmul.mubr.f32.gmra.mxu0 %v264
  %v344 = vpop.f32.mrf.mxu0
  %v345 = vadd.f32 0.0, %v344
  %v346 = vpop.f32.mrf.mxu0
  %347 = vmatprep.mubr.f32.mxu0 0.0
  %348 = vmatmul.mubr.f32.gmra.mxu0 %v267
  %v349 = vpop.f32.mrf.mxu0
  %v350 = vadd.f32 0.0, %v349
  %v351 = vpop.f32.mrf.mxu0
  %352 = vdwg.mxu0
  %v354 = vsel %vm82, %v23, 0
  %v357 = vsel %vm82, %v24, 0
  %v360 = vsel %vm82, %v42, 0
  %v363 = vsel %vm82, %v43, 0
  %v366 = vsel %vm82, %v44, 0
  %368 = vmatprep.subr.mxu0 0.0
  %369 = vmatpush1.xpose.msra.mxu0 0.0
  %370 = vmatprep.subr.mxu0 0.0
  %371 = vmatpush1.xpose.msra.mxu0 0.0
  %372 = vmatprep.subr.mxu0 0.0
  %373 = vmatpush1.xpose.msra.mxu0 0.0
  %374 = vmatprep.subr.mxu0 0.0
  %375 = vmatpush1.xpose.msra.mxu0 0.0
  %376 = vmatprep.subr.mxu0 0.0
  %377 = vmatpush1.xpose.msra.mxu0 0.0
  %378 = vmatprep.subr.mxu0 0.0
  %379 = vmatpush1.xpose.msra.mxu0 0.0
  %380 = vmatprep.subr.mxu0 0.0
  %381 = vmatpush1.xpose.msra.mxu0 0.0
  %382 = vmatprep.subr.mxu0 0.0
  %383 = vmatpush1.xpose.msra.mxu0 0.0
  %384 = vmatprep.subr.mxu0 0.0
  %385 = vmatpush1.xpose.msra.mxu0 0.0
  %386 = vmatprep.subr.mxu0 0.0
  %387 = vmatpush1.xpose.msra.mxu0 0.0
  %388 = vmatprep.subr.mxu0 0.0
  %389 = vmatpush1.xpose.msra.mxu0 0.0
  %390 = vmatprep.subr.mxu0 0.0
  %391 = vmatpush1.xpose.msra.mxu0 0.0
  %392 = vmatprep.subr.mxu0 0.0
  %393 = vmatpush1.xpose.msra.mxu0 0.0
  %394 = vmatprep.subr.mxu0 0.0
  %395 = vmatpush1.xpose.msra.mxu0 %v366
  %396 = vmatprep.subr.mxu0 0.0
  %397 = vmatpush1.xpose.msra.mxu0 %v363
  %398 = vmatprep.subr.mxu0 0.0
  %399 = vmatpush1.xpose.msra.mxu0 %v360
  %400 = vmatprep.subr.mxu0 0.0
  %401 = vmatpush2.xpose.msra.mxu0 0.0
  %402 = vmatprep.subr.mxu0 0.0
  %403 = vmatpush2.xpose.msra.mxu0 0.0
  %404 = vmatprep.subr.mxu0 0.0
  %405 = vmatpush2.xpose.msra.mxu0 0.0
  %406 = vmatprep.subr.mxu0 0.0
  %407 = vmatpush2.xpose.msra.mxu0 0.0
  %408 = vmatprep.subr.mxu0 0.0
  %409 = vmatpush2.xpose.msra.mxu0 0.0
  %410 = vmatprep.subr.mxu0 0.0
  %411 = vmatpush2.xpose.msra.mxu0 0.0
  %412 = vmatprep.subr.mxu0 0.0
  %413 = vmatpush2.xpose.msra.mxu0 0.0
  %414 = vmatprep.subr.mxu0 0.0
  %415 = vmatpush2.xpose.msra.mxu0 0.0
  %416 = vmatprep.subr.mxu0 0.0
  %417 = vmatpush2.xpose.msra.mxu0 0.0
  %418 = vmatprep.subr.mxu0 0.0
  %419 = vmatpush2.xpose.msra.mxu0 0.0
  %420 = vmatprep.subr.mxu0 0.0
  %421 = vmatpush2.xpose.msra.mxu0 0.0
  %422 = vmatprep.subr.mxu0 0.0
  %423 = vmatpush2.xpose.msra.mxu0 0.0
  %424 = vmatprep.subr.mxu0 0.0
  %425 = vmatpush2.xpose.msra.mxu0 0.0
  %426 = vmatprep.subr.mxu0 0.0
  %427 = vmatpush2.xpose.msra.mxu0 0.0
  %428 = vmatprep.subr.mxu0 0.0
  %429 = vmatpush2.xpose.msra.mxu0 0.0
  %430 = vmatprep.subr.mxu0 0.0
  %431 = vmatpush2.xpose.msra.mxu0 0.0
  %432 = vmatprep.mubr.f32.mxu0 0.0
  %433 = vmatmul.mubr.f32.gmra.mxu0 %v354
  %v434 = vpop.f32.mrf.mxu0
  %v435 = vadd.f32 0.0, %v434
  %v436 = vpop.f32.mrf.mxu0
  %437 = vmatprep.mubr.f32.mxu0 0.0
  %438 = vmatmul.mubr.f32.gmra.mxu0 %v357
  %v439 = vpop.f32.mrf.mxu0
  %v440 = vadd.f32 0.0, %v439
  %v441 = vpop.f32.mrf.mxu0
  %442 = vdwg.mxu0
  %v444 = vsel %vm82, %v25, 0
  %v447 = vsel %vm82, %v26, 0
  %v450 = vsel %vm82, %v45, 0
  %v453 = vsel %vm82, %v46, 0
  %v456 = vsel %vm82, %v47, 0
  %458 = vmatprep.subr.mxu0 0.0
  %459 = vmatpush1.xpose.msra.mxu0 0.0
  %460 = vmatprep.subr.mxu0 0.0
  %461 = vmatpush1.xpose.msra.mxu0 0.0
  %462 = vmatprep.subr.mxu0 0.0
  %463 = vmatpush1.xpose.msra.mxu0 0.0
  %464 = vmatprep.subr.mxu0 0.0
  %465 = vmatpush1.xpose.msra.mxu0 0.0
  %466 = vmatprep.subr.mxu0 0.0
  %467 = vmatpush1.xpose.msra.mxu0 0.0
  %468 = vmatprep.subr.mxu0 0.0
  %469 = vmatpush1.xpose.msra.mxu0 0.0
  %470 = vmatprep.subr.mxu0 0.0
  %471 = vmatpush1.xpose.msra.mxu0 0.0
  %472 = vmatprep.subr.mxu0 0.0
  %473 = vmatpush1.xpose.msra.mxu0 0.0
  %474 = vmatprep.subr.mxu0 0.0
  %475 = vmatpush1.xpose.msra.mxu0 0.0
  %476 = vmatprep.subr.mxu0 0.0
  %477 = vmatpush1.xpose.msra.mxu0 0.0
  %478 = vmatprep.subr.mxu0 0.0
  %479 = vmatpush1.xpose.msra.mxu0 0.0
  %480 = vmatprep.subr.mxu0 0.0
  %481 = vmatpush1.xpose.msra.mxu0 0.0
  %482 = vmatprep.subr.mxu0 0.0
  %483 = vmatpush1.xpose.msra.mxu0 0.0
  %484 = vmatprep.subr.mxu0 0.0
  %485 = vmatpush1.xpose.msra.mxu0 %v456
  %486 = vmatprep.subr.mxu0 0.0
  %487 = vmatpush1.xpose.msra.mxu0 %v453
  %488 = vmatprep.subr.mxu0 0.0
  %489 = vmatpush1.xpose.msra.mxu0 %v450
  %490 = vmatprep.subr.mxu0 0.0
  %491 = vmatpush2.xpose.msra.mxu0 0.0
  %492 = vmatprep.subr.mxu0 0.0
  %493 = vmatpush2.xpose.msra.mxu0 0.0
  %494 = vmatprep.subr.mxu0 0.0
  %495 = vmatpush2.xpose.msra.mxu0 0.0
  %496 = vmatprep.subr.mxu0 0.0
  %497 = vmatpush2.xpose.msra.mxu0 0.0
  %498 = vmatprep.subr.mxu0 0.0
  %499 = vmatpush2.xpose.msra.mxu0 0.0
  %500 = vmatprep.subr.mxu0 0.0
  %501 = vmatpush2.xpose.msra.mxu0 0.0
  %502 = vmatprep.subr.mxu0 0.0
  %503 = vmatpush2.xpose.msra.mxu0 0.0
  %504 = vmatprep.subr.mxu0 0.0
  %505 = vmatpush2.xpose.msra.mxu0 0.0
  %506 = vmatprep.subr.mxu0 0.0
  %507 = vmatpush2.xpose.msra.mxu0 0.0
  %508 = vmatprep.subr.mxu0 0.0
  %509 = vmatpush2.xpose.msra.mxu0 0.0
  %510 = vmatprep.subr.mxu0 0.0
  %511 = vmatpush2.xpose.msra.mxu0 0.0
  %512 = vmatprep.subr.mxu0 0.0
  %513 = vmatpush2.xpose.msra.mxu0 0.0
  %514 = vmatprep.subr.mxu0 0.0
  %515 = vmatpush2.xpose.msra.mxu0 0.0
  %516 = vmatprep.subr.mxu0 0.0
  %517 = vmatpush2.xpose.msra.mxu0 0.0
  %518 = vmatprep.subr.mxu0 0.0
  %519 = vmatpush2.xpose.msra.mxu0 0.0
  %520 = vmatprep.subr.mxu0 0.0
  %521 = vmatpush2.xpose.msra.mxu0 0.0
  %522 = vmatprep.mubr.f32.mxu0 0.0
  %523 = vmatmul.mubr.f32.gmra.mxu0 %v444
  %v524 = vpop.f32.mrf.mxu0
  %v525 = vadd.f32 0.0, %v524
  %v526 = vpop.f32.mrf.mxu0
  %527 = vmatprep.mubr.f32.mxu0 0.0
  %528 = vmatmul.mubr.f32.gmra.mxu0 %v447
  %v529 = vpop.f32.mrf.mxu0
  %v530 = vadd.f32 0.0, %v529
  %v531 = vpop.f32.mrf.mxu0
  %532 = vdwg.mxu0
  %v534 = vsel %vm82, %v27, 0
  %v537 = vsel %vm82, %v28, 0
  %v540 = vsel %vm82, %v48, 0
  %v543 = vsel %vm82, %v49, 0
  %v546 = vsel %vm82, %v50, 0
  %548 = vmatprep.subr.mxu0 0.0
  %549 = vmatpush1.xpose.msra.mxu0 0.0
  %550 = vmatprep.subr.mxu0 0.0
  %551 = vmatpush1.xpose.msra.mxu0 0.0
  %552 = vmatprep.subr.mxu0 0.0
  %553 = vmatpush1.xpose.msra.mxu0 0.0
  %554 = vmatprep.subr.mxu0 0.0
  %555 = vmatpush1.xpose.msra.mxu0 0.0
  %556 = vmatprep.subr.mxu0 0.0
  %557 = vmatpush1.xpose.msra.mxu0 0.0
  %558 = vmatprep.subr.mxu0 0.0
  %559 = vmatpush1.xpose.msra.mxu0 0.0
  %560 = vmatprep.subr.mxu0 0.0
  %561 = vmatpush1.xpose.msra.mxu0 0.0
  %562 = vmatprep.subr.mxu0 0.0
  %563 = vmatpush1.xpose.msra.mxu0 0.0
  %564 = vmatprep.subr.mxu0 0.0
  %565 = vmatpush1.xpose.msra.mxu0 0.0
  %566 = vmatprep.subr.mxu0 0.0
  %567 = vmatpush1.xpose.msra.mxu0 0.0
  %568 = vmatprep.subr.mxu0 0.0
  %569 = vmatpush1.xpose.msra.mxu0 0.0
  %570 = vmatprep.subr.mxu0 0.0
  %571 = vmatpush1.xpose.msra.mxu0 0.0
  %572 = vmatprep.subr.mxu0 0.0
  %573 = vmatpush1.xpose.msra.mxu0 0.0
  %574 = vmatprep.subr.mxu0 0.0
  %575 = vmatpush1.xpose.msra.mxu0 %v546
  %576 = vmatprep.subr.mxu0 0.0
  %577 = vmatpush1.xpose.msra.mxu0 %v543
  %578 = vmatprep.subr.mxu0 0.0
  %579 = vmatpush1.xpose.msra.mxu0 %v540
  %580 = vmatprep.subr.mxu0 0.0
  %581 = vmatpush2.xpose.msra.mxu0 0.0
  %582 = vmatprep.subr.mxu0 0.0
  %583 = vmatpush2.xpose.msra.mxu0 0.0
  %584 = vmatprep.subr.mxu0 0.0
  %585 = vmatpush2.xpose.msra.mxu0 0.0
  %586 = vmatprep.subr.mxu0 0.0
  %587 = vmatpush2.xpose.msra.mxu0 0.0
  %588 = vmatprep.subr.mxu0 0.0
  %589 = vmatpush2.xpose.msra.mxu0 0.0
  %590 = vmatprep.subr.mxu0 0.0
  %591 = vmatpush2.xpose.msra.mxu0 0.0
  %592 = vmatprep.subr.mxu0 0.0
  %593 = vmatpush2.xpose.msra.mxu0 0.0
  %594 = vmatprep.subr.mxu0 0.0
  %595 = vmatpush2.xpose.msra.mxu0 0.0
  %596 = vmatprep.subr.mxu0 0.0
  %597 = vmatpush2.xpose.msra.mxu0 0.0
  %598 = vmatprep.subr.mxu0 0.0
  %599 = vmatpush2.xpose.msra.mxu0 0.0
  %600 = vmatprep.subr.mxu0 0.0
  %601 = vmatpush2.xpose.msra.mxu0 0.0
  %602 = vmatprep.subr.mxu0 0.0
  %603 = vmatpush2.xpose.msra.mxu0 0.0
  %604 = vmatprep.subr.mxu0 0.0
  %605 = vmatpush2.xpose.msra.mxu0 0.0
  %606 = vmatprep.subr.mxu0 0.0
  %607 = vmatpush2.xpose.msra.mxu0 0.0
  %608 = vmatprep.subr.mxu0 0.0
  %609 = vmatpush2.xpose.msra.mxu0 0.0
  %610 = vmatprep.subr.mxu0 0.0
  %611 = vmatpush2.xpose.msra.mxu0 0.0
  %612 = vmatprep.mubr.f32.mxu0 0.0
  %613 = vmatmul.mubr.f32.gmra.mxu0 %v534
  %v614 = vpop.f32.mrf.mxu0
  %v615 = vadd.f32 0.0, %v614
  %v616 = vpop.f32.mrf.mxu0
  %617 = vmatprep.mubr.f32.mxu0 0.0
  %618 = vmatmul.mubr.f32.gmra.mxu0 %v537
  %v619 = vpop.f32.mrf.mxu0
  %v620 = vadd.f32 0.0, %v619
  %v621 = vpop.f32.mrf.mxu0
  %622 = vdwg.mxu0
  %v624 = vsel %vm82, %v29, 0
  %v627 = vsel %vm82, %v30, 0
  %v630 = vsel %vm82, %v51, 0
  %v633 = vsel %vm82, %v52, 0
  %v636 = vsel %vm82, %v53, 0
  %638 = vmatprep.subr.mxu0 0.0
  %639 = vmatpush1.xpose.msra.mxu0 0.0
  %640 = vmatprep.subr.mxu0 0.0
  %641 = vmatpush1.xpose.msra.mxu0 0.0
  %642 = vmatprep.subr.mxu0 0.0
  %643 = vmatpush1.xpose.msra.mxu0 0.0
  %644 = vmatprep.subr.mxu0 0.0
  %645 = vmatpush1.xpose.msra.mxu0 0.0
  %646 = vmatprep.subr.mxu0 0.0
  %647 = vmatpush1.xpose.msra.mxu0 0.0
  %648 = vmatprep.subr.mxu0 0.0
  %649 = vmatpush1.xpose.msra.mxu0 0.0
  %650 = vmatprep.subr.mxu0 0.0
  %651 = vmatpush1.xpose.msra.mxu0 0.0
  %652 = vmatprep.subr.mxu0 0.0
  %653 = vmatpush1.xpose.msra.mxu0 0.0
  %654 = vmatprep.subr.mxu0 0.0
  %655 = vmatpush1.xpose.msra.mxu0 0.0
  %656 = vmatprep.subr.mxu0 0.0
  %657 = vmatpush1.xpose.msra.mxu0 0.0
  %658 = vmatprep.subr.mxu0 0.0
  %659 = vmatpush1.xpose.msra.mxu0 0.0
  %660 = vmatprep.subr.mxu0 0.0
  %661 = vmatpush1.xpose.msra.mxu0 0.0
  %662 = vmatprep.subr.mxu0 0.0
  %663 = vmatpush1.xpose.msra.mxu0 0.0
  %664 = vmatprep.subr.mxu0 0.0
  %665 = vmatpush1.xpose.msra.mxu0 %v636
  %666 = vmatprep.subr.mxu0 0.0
  %667 = vmatpush1.xpose.msra.mxu0 %v633
  %668 = vmatprep.subr.mxu0 0.0
  %669 = vmatpush1.xpose.msra.mxu0 %v630
  %670 = vmatprep.subr.mxu0 0.0
  %671 = vmatpush2.xpose.msra.mxu0 0.0
  %672 = vmatprep.subr.mxu0 0.0
  %673 = vmatpush2.xpose.msra.mxu0 0.0
  %674 = vmatprep.subr.mxu0 0.0
  %675 = vmatpush2.xpose.msra.mxu0 0.0
  %676 = vmatprep.subr.mxu0 0.0
  %677 = vmatpush2.xpose.msra.mxu0 0.0
  %678 = vmatprep.subr.mxu0 0.0
  %679 = vmatpush2.xpose.msra.mxu0 0.0
  %680 = vmatprep.subr.mxu0 0.0
  %681 = vmatpush2.xpose.msra.mxu0 0.0
  %682 = vmatprep.subr.mxu0 0.0
  %683 = vmatpush2.xpose.msra.mxu0 0.0
  %684 = vmatprep.subr.mxu0 0.0
  %685 = vmatpush2.xpose.msra.mxu0 0.0
  %686 = vmatprep.subr.mxu0 0.0
  %687 = vmatpush2.xpose.msra.mxu0 0.0
  %688 = vmatprep.subr.mxu0 0.0
  %689 = vmatpush2.xpose.msra.mxu0 0.0
  %690 = vmatprep.subr.mxu0 0.0
  %691 = vmatpush2.xpose.msra.mxu0 0.0
  %692 = vmatprep.subr.mxu0 0.0
  %693 = vmatpush2.xpose.msra.mxu0 0.0
  %694 = vmatprep.subr.mxu0 0.0
  %695 = vmatpush2.xpose.msra.mxu0 0.0
  %696 = vmatprep.subr.mxu0 0.0
  %697 = vmatpush2.xpose.msra.mxu0 0.0
  %698 = vmatprep.subr.mxu0 0.0
  %699 = vmatpush2.xpose.msra.mxu0 0.0
  %700 = vmatprep.subr.mxu0 0.0
  %701 = vmatpush2.xpose.msra.mxu0 0.0
  %702 = vmatprep.mubr.f32.mxu0 0.0
  %703 = vmatmul.mubr.f32.gmra.mxu0 %v624
  %v704 = vpop.f32.mrf.mxu0
  %v705 = vadd.f32 0.0, %v704
  %v706 = vpop.f32.mrf.mxu0
  %707 = vmatprep.mubr.f32.mxu0 0.0
  %708 = vmatmul.mubr.f32.gmra.mxu0 %v627
  %v709 = vpop.f32.mrf.mxu0
  %v710 = vadd.f32 0.0, %v709
  %v711 = vpop.f32.mrf.mxu0
  %712 = vdwg.mxu0
  %v714 = vsel %vm82, %v31, 0
  %v717 = vsel %vm82, %v32, 0
  %v720 = vsel %vm82, %v54, 0
  %v723 = vsel %vm82, %v55, 0
  %v726 = vsel %vm82, %v56, 0
  %728 = vmatprep.subr.mxu0 0.0
  %729 = vmatpush1.xpose.msra.mxu0 0.0
  %730 = vmatprep.subr.mxu0 0.0
  %731 = vmatpush1.xpose.msra.mxu0 0.0
  %732 = vmatprep.subr.mxu0 0.0
  %733 = vmatpush1.xpose.msra.mxu0 0.0
  %734 = vmatprep.subr.mxu0 0.0
  %735 = vmatpush1.xpose.msra.mxu0 0.0
  %736 = vmatprep.subr.mxu0 0.0
  %737 = vmatpush1.xpose.msra.mxu0 0.0
  %738 = vmatprep.subr.mxu0 0.0
  %739 = vmatpush1.xpose.msra.mxu0 0.0
  %740 = vmatprep.subr.mxu0 0.0
  %741 = vmatpush1.xpose.msra.mxu0 0.0
  %742 = vmatprep.subr.mxu0 0.0
  %743 = vmatpush1.xpose.msra.mxu0 0.0
  %744 = vmatprep.subr.mxu0 0.0
  %745 = vmatpush1.xpose.msra.mxu0 0.0
  %746 = vmatprep.subr.mxu0 0.0
  %747 = vmatpush1.xpose.msra.mxu0 0.0
  %748 = vmatprep.subr.mxu0 0.0
  %749 = vmatpush1.xpose.msra.mxu0 0.0
  %750 = vmatprep.subr.mxu0 0.0
  %751 = vmatpush1.xpose.msra.mxu0 0.0
  %752 = vmatprep.subr.mxu0 0.0
  %753 = vmatpush1.xpose.msra.mxu0 0.0
  %754 = vmatprep.subr.mxu0 0.0
  %755 = vmatpush1.xpose.msra.mxu0 %v726
  %756 = vmatprep.subr.mxu0 0.0
  %757 = vmatpush1.xpose.msra.mxu0 %v723
  %758 = vmatprep.subr.mxu0 0.0
  %759 = vmatpush1.xpose.msra.mxu0 %v720
  %760 = vmatprep.subr.mxu0 0.0
  %761 = vmatpush2.xpose.msra.mxu0 0.0
  %762 = vmatprep.subr.mxu0 0.0
  %763 = vmatpush2.xpose.msra.mxu0 0.0
  %764 = vmatprep.subr.mxu0 0.0
  %765 = vmatpush2.xpose.msra.mxu0 0.0
  %766 = vmatprep.subr.mxu0 0.0
  %767 = vmatpush2.xpose.msra.mxu0 0.0
  %768 = vmatprep.subr.mxu0 0.0
  %769 = vmatpush2.xpose.msra.mxu0 0.0
  %770 = vmatprep.subr.mxu0 0.0
  %771 = vmatpush2.xpose.msra.mxu0 0.0
  %772 = vmatprep.subr.mxu0 0.0
  %773 = vmatpush2.xpose.msra.mxu0 0.0
  %774 = vmatprep.subr.mxu0 0.0
  %775 = vmatpush2.xpose.msra.mxu0 0.0
  %776 = vmatprep.subr.mxu0 0.0
  %777 = vmatpush2.xpose.msra.mxu0 0.0
  %778 = vmatprep.subr.mxu0 0.0
  %779 = vmatpush2.xpose.msra.mxu0 0.0
  %780 = vmatprep.subr.mxu0 0.0
  %781 = vmatpush2.xpose.msra.mxu0 0.0
  %782 = vmatprep.subr.mxu0 0.0
  %783 = vmatpush2.xpose.msra.mxu0 0.0
  %784 = vmatprep.subr.mxu0 0.0
  %785 = vmatpush2.xpose.msra.mxu0 0.0
  %786 = vmatprep.subr.mxu0 0.0
  %787 = vmatpush2.xpose.msra.mxu0 0.0
  %788 = vmatprep.subr.mxu0 0.0
  %789 = vmatpush2.xpose.msra.mxu0 0.0
  %790 = vmatprep.subr.mxu0 0.0
  %791 = vmatpush2.xpose.msra.mxu0 0.0
  %792 = vmatprep.mubr.f32.mxu0 0.0
  %793 = vmatmul.mubr.f32.gmra.mxu0 %v714
  %v794 = vpop.f32.mrf.mxu0
  %v795 = vadd.f32 0.0, %v794
  %v796 = vpop.f32.mrf.mxu0
  %797 = vmatprep.mubr.f32.mxu0 0.0
  %798 = vmatmul.mubr.f32.gmra.mxu0 %v717
  %v799 = vpop.f32.mrf.mxu0
  %v800 = vadd.f32 0.0, %v799
  %v801 = vpop.f32.mrf.mxu0
  %802 = vdwg.mxu0
  %v803 = vrcp.pop %v81
  %v804 = vmul.f32 1.0, %v803
  %v806 = vlaneseq
  %v807 = vshrl.u32 %v806, 7
  %v808 = vsub.s32 0, %v807
  %v809 = vrot.slane %v804, %v808
  %v811 = vmul.f32 %v165, %v809
  %v812 = vmul.f32 %v170, %v809
  %v813 = vmul.f32 %v255, %v809
  %v814 = vmul.f32 %v260, %v809
  %v815 = vmul.f32 %v345, %v809
  %v816 = vmul.f32 %v350, %v809
  %v817 = vmul.f32 %v435, %v809
  %v818 = vmul.f32 %v440, %v809
  %v819 = vmul.f32 %v525, %v809
  %v820 = vmul.f32 %v530, %v809
  %v821 = vmul.f32 %v615, %v809
  %v822 = vmul.f32 %v620, %v809
  %v823 = vmul.f32 %v705, %v809
  %v824 = vmul.f32 %v710, %v809
  %v825 = vmul.f32 %v795, %v809
  %v826 = vmul.f32 %v800, %v809
  %vm827 = vcmask 162816
  %v828 = vsel %vm827, %v811, -inf
  %829 = vmax.xlane.f32.xlu0 %v828
  %v830 = vpop.xlane.xlu0 %829
  %v831 = vsel %vm827, %v812, -inf
  %832 = vmax.xlane.f32.xlu0 %v831
  %v833 = vpop.xlane.xlu0 %832
  %v834 = vsel %vm827, %v813, -inf
  %835 = vmax.xlane.f32.xlu0 %v834
  %v836 = vpop.xlane.xlu0 %835
  %v837 = vsel %vm827, %v814, -inf
  %838 = vmax.xlane.f32.xlu0 %v837
  %v839 = vpop.xlane.xlu0 %838
  %v840 = vsel %vm827, %v815, -inf
  %841 = vmax.xlane.f32.xlu0 %v840
  %v842 = vpop.xlane.xlu0 %841
  %v843 = vsel %vm827, %v816, -inf
  %844 = vmax.xlane.f32.xlu0 %v843
  %v845 = vpop.xlane.xlu0 %844
  %v846 = vsel %vm827, %v817, -inf
  %847 = vmax.xlane.f32.xlu0 %v846
  %v848 = vpop.xlane.xlu0 %847
  %v849 = vsel %vm827, %v818, -inf
  %850 = vmax.xlane.f32.xlu0 %v849
  %v851 = vpop.xlane.xlu0 %850
  %v852 = vsel %vm827, %v819, -inf
  %853 = vmax.xlane.f32.xlu0 %v852
  %v854 = vpop.xlane.xlu0 %853
  %v855 = vsel %vm827, %v820, -inf
  %856 = vmax.xlane.f32.xlu0 %v855
  %v857 = vpop.xlane.xlu0 %856
  %v858 = vsel %vm827, %v821, -inf
  %859 = vmax.xlane.f32.xlu0 %v858
  %v860 = vpop.xlane.xlu0 %859
  %v861 = vsel %vm827, %v822, -inf
  %862 = vmax.xlane.f32.xlu0 %v861
  %v863 = vpop.xlane.xlu0 %862
  %v864 = vsel %vm827, %v823, -inf
  %865 = vmax.xlane.f32.xlu0 %v864
  %v866 = vpop.xlane.xlu0 %865
  %v867 = vsel %vm827, %v824, -inf
  %868 = vmax.xlane.f32.xlu0 %v867
  %v869 = vpop.xlane.xlu0 %868
  %v870 = vsel %vm827, %v825, -inf
  %871 = vmax.xlane.f32.xlu0 %v870
  %v872 = vpop.xlane.xlu0 %871
  %v873 = vsel %vm827, %v826, -inf
  %874 = vmax.xlane.f32.xlu0 %v873
  %v875 = vpop.xlane.xlu0 %874
  %v876 = vsub.f32 %v811, %v830
  %v877 = vsub.f32 %v812, %v833
  %v878 = vsub.f32 %v813, %v836
  %v879 = vsub.f32 %v814, %v839
  %v880 = vsub.f32 %v815, %v842
  %v881 = vsub.f32 %v816, %v845
  %v882 = vsub.f32 %v817, %v848
  %v883 = vsub.f32 %v818, %v851
  %v884 = vsub.f32 %v819, %v854
  %v885 = vsub.f32 %v820, %v857
  %v886 = vsub.f32 %v821, %v860
  %v887 = vsub.f32 %v822, %v863
  %v888 = vsub.f32 %v823, %v866
  %v889 = vsub.f32 %v824, %v869
  %v890 = vsub.f32 %v825, %v872
  %v891 = vsub.f32 %v826, %v875
  %v892 = vmul.f32 %v876, 1.442695
  %v893 = vpow.pop %v892
  %v894 = vmul.f32 %v877, 1.442695
  %v895 = vpow.pop %v894
  %v896 = vmul.f32 %v878, 1.442695
  %v897 = vpow.pop %v896
  %v898 = vmul.f32 %v879, 1.442695
  %v899 = vpow.pop %v898
  %v900 = vmul.f32 %v880, 1.442695
  %v901 = vpow.pop %v900
  %v902 = vmul.f32 %v881, 1.442695
  %v903 = vpow.pop %v902
  %v904 = vmul.f32 %v882, 1.442695
  %v905 = vpow.pop %v904
  %v906 = vmul.f32 %v883, 1.442695
  %v907 = vpow.pop %v906
  %v908 = vmul.f32 %v884, 1.442695
  %v909 = vpow.pop %v908
  %v910 = vmul.f32 %v885, 1.442695
  %v911 = vpow.pop %v910
  %v912 = vmul.f32 %v886, 1.442695
  %v913 = vpow.pop %v912
  %v914 = vmul.f32 %v887, 1.442695
  %v915 = vpow.pop %v914
  %v916 = vmul.f32 %v888, 1.442695
  %v917 = vpow.pop %v916
  %v918 = vmul.f32 %v889, 1.442695
  %v919 = vpow.pop %v918
  %v920 = vmul.f32 %v890, 1.442695
  %v921 = vpow.pop %v920
  %v922 = vmul.f32 %v891, 1.442695
  %v923 = vpow.pop %v922
  %v924 = vsel %vm827, %v893, 0.0
  %925 = vadd.xlane.f32.xlu0 %v924
  %v926 = vpop.xlane.xlu0 %925
  %v927 = vsel %vm827, %v895, 0.0
  %928 = vadd.xlane.f32.xlu0 %v927
  %v929 = vpop.xlane.xlu0 %928
  %v930 = vsel %vm827, %v897, 0.0
  %931 = vadd.xlane.f32.xlu0 %v930
  %v932 = vpop.xlane.xlu0 %931
  %v933 = vsel %vm827, %v899, 0.0
  %934 = vadd.xlane.f32.xlu0 %v933
  %v935 = vpop.xlane.xlu0 %934
  %v936 = vsel %vm827, %v901, 0.0
  %937 = vadd.xlane.f32.xlu0 %v936
  %v938 = vpop.xlane.xlu0 %937
  %v939 = vsel %vm827, %v903, 0.0
  %940 = vadd.xlane.f32.xlu0 %v939
  %v941 = vpop.xlane.xlu0 %940
  %v942 = vsel %vm827, %v905, 0.0
  %943 = vadd.xlane.f32.xlu0 %v942
  %v944 = vpop.xlane.xlu0 %943
  %v945 = vsel %vm827, %v907, 0.0
  %946 = vadd.xlane.f32.xlu0 %v945
  %v947 = vpop.xlane.xlu0 %946
  %v948 = vsel %vm827, %v909, 0.0
  %949 = vadd.xlane.f32.xlu0 %v948
  %v950 = vpop.xlane.xlu0 %949
  %v951 = vsel %vm827, %v911, 0.0
  %952 = vadd.xlane.f32.xlu0 %v951
  %v953 = vpop.xlane.xlu0 %952
  %v954 = vsel %vm827, %v913, 0.0
  %955 = vadd.xlane.f32.xlu0 %v954
  %v956 = vpop.xlane.xlu0 %955
  %v957 = vsel %vm827, %v915, 0.0
  %958 = vadd.xlane.f32.xlu0 %v957
  %v959 = vpop.xlane.xlu0 %958
  %v960 = vsel %vm827, %v917, 0.0
  %961 = vadd.xlane.f32.xlu0 %v960
  %v962 = vpop.xlane.xlu0 %961
  %v963 = vsel %vm827, %v919, 0.0
  %964 = vadd.xlane.f32.xlu0 %v963
  %v965 = vpop.xlane.xlu0 %964
  %v966 = vsel %vm827, %v921, 0.0
  %967 = vadd.xlane.f32.xlu0 %v966
  %v968 = vpop.xlane.xlu0 %967
  %v969 = vsel %vm827, %v923, 0.0
  %970 = vadd.xlane.f32.xlu0 %v969
  %v971 = vpop.xlane.xlu0 %970
  %v973 = vsel %vm827, %v893, 0
  %v976 = vsel %vm827, %v895, 0
  %vm978 = vcmask 1043456
  %v980 = vsel %vm978, %v59, 0
  %982 = vmatprep.subr.mxu0 0.0
  %983 = vmatpush1.msra.mxu0 0.0
  %984 = vmatprep.subr.mxu0 0.0
  %985 = vmatpush1.msra.mxu0 0.0
  %986 = vmatprep.subr.mxu0 0.0
  %987 = vmatpush1.msra.mxu0 0.0
  %988 = vmatprep.subr.mxu0 0.0
  %989 = vmatpush1.msra.mxu0 0.0
  %990 = vmatprep.subr.mxu0 0.0
  %991 = vmatpush1.msra.mxu0 0.0
  %992 = vmatprep.subr.mxu0 0.0
  %993 = vmatpush1.msra.mxu0 0.0
  %994 = vmatprep.subr.mxu0 0.0
  %995 = vmatpush1.msra.mxu0 0.0
  %996 = vmatprep.subr.mxu0 0.0
  %997 = vmatpush1.msra.mxu0 0.0
  %998 = vmatprep.subr.mxu0 0.0
  %999 = vmatpush1.msra.mxu0 0.0
  %1000 = vmatprep.subr.mxu0 0.0
  %1001 = vmatpush1.msra.mxu0 0.0
  %1002 = vmatprep.subr.mxu0 0.0
  %1003 = vmatpush1.msra.mxu0 0.0
  %1004 = vmatprep.subr.mxu0 0.0
  %1005 = vmatpush1.msra.mxu0 0.0
  %1006 = vmatprep.subr.mxu0 0.0
  %1007 = vmatpush1.msra.mxu0 0.0
  %1008 = vmatprep.subr.mxu0 0.0
  %1009 = vmatpush1.msra.mxu0 %v980
  %1010 = vmatprep.subr.mxu0 0.0
  %1011 = vmatpush1.msra.mxu0 %v58
  %1012 = vmatprep.subr.mxu0 0.0
  %1013 = vmatpush1.msra.mxu0 %v57
  %1014 = vmatprep.subr.mxu0 0.0
  %1015 = vmatpush2.msra.mxu0 0.0
  %1016 = vmatprep.subr.mxu0 0.0
  %1017 = vmatpush2.msra.mxu0 0.0
  %1018 = vmatprep.subr.mxu0 0.0
  %1019 = vmatpush2.msra.mxu0 0.0
  %1020 = vmatprep.subr.mxu0 0.0
  %1021 = vmatpush2.msra.mxu0 0.0
  %1022 = vmatprep.subr.mxu0 0.0
  %1023 = vmatpush2.msra.mxu0 0.0
  %1024 = vmatprep.subr.mxu0 0.0
  %1025 = vmatpush2.msra.mxu0 0.0
  %1026 = vmatprep.subr.mxu0 0.0
  %1027 = vmatpush2.msra.mxu0 0.0
  %1028 = vmatprep.subr.mxu0 0.0
  %1029 = vmatpush2.msra.mxu0 0.0
  %1030 = vmatprep.subr.mxu0 0.0
  %1031 = vmatpush2.msra.mxu0 0.0
  %1032 = vmatprep.subr.mxu0 0.0
  %1033 = vmatpush2.msra.mxu0 0.0
  %1034 = vmatprep.subr.mxu0 0.0
  %1035 = vmatpush2.msra.mxu0 0.0
  %1036 = vmatprep.subr.mxu0 0.0
  %1037 = vmatpush2.msra.mxu0 0.0
  %1038 = vmatprep.subr.mxu0 0.0
  %1039 = vmatpush2.msra.mxu0 0.0
  %1040 = vmatprep.subr.mxu0 0.0
  %1041 = vmatpush2.msra.mxu0 0.0
  %1042 = vmatprep.subr.mxu0 0.0
  %1043 = vmatpush2.msra.mxu0 0.0
  %1044 = vmatprep.subr.mxu0 0.0
  %1045 = vmatpush2.msra.mxu0 0.0
  %1046 = vmatprep.mubr.f32.mxu0 0.0
  %1047 = vmatmul.mubr.f32.gmra.mxu0 %v973
  %v1048 = vpop.f32.mrf.mxu0
  %v1049 = vadd.f32 0.0, %v1048
  %v1050 = vpop.f32.mrf.mxu0
  %1051 = vmatprep.mubr.f32.mxu0 0.0
  %1052 = vmatmul.mubr.f32.gmra.mxu0 %v976
  %v1053 = vpop.f32.mrf.mxu0
  %v1054 = vadd.f32 0.0, %v1053
  %v1055 = vpop.f32.mrf.mxu0
  %1056 = vdwg.mxu0
  %v1058 = vsel %vm827, %v897, 0
  %v1061 = vsel %vm827, %v899, 0
  %v1064 = vsel %vm978, %v62, 0
  %1066 = vmatprep.subr.mxu0 0.0
  %1067 = vmatpush1.msra.mxu0 0.0
  %1068 = vmatprep.subr.mxu0 0.0
  %1069 = vmatpush1.msra.mxu0 0.0
  %1070 = vmatprep.subr.mxu0 0.0
  %1071 = vmatpush1.msra.mxu0 0.0
  %1072 = vmatprep.subr.mxu0 0.0
  %1073 = vmatpush1.msra.mxu0 0.0
  %1074 = vmatprep.subr.mxu0 0.0
  %1075 = vmatpush1.msra.mxu0 0.0
  %1076 = vmatprep.subr.mxu0 0.0
  %1077 = vmatpush1.msra.mxu0 0.0
  %1078 = vmatprep.subr.mxu0 0.0
  %1079 = vmatpush1.msra.mxu0 0.0
  %1080 = vmatprep.subr.mxu0 0.0
  %1081 = vmatpush1.msra.mxu0 0.0
  %1082 = vmatprep.subr.mxu0 0.0
  %1083 = vmatpush1.msra.mxu0 0.0
  %1084 = vmatprep.subr.mxu0 0.0
  %1085 = vmatpush1.msra.mxu0 0.0
  %1086 = vmatprep.subr.mxu0 0.0
  %1087 = vmatpush1.msra.mxu0 0.0
  %1088 = vmatprep.subr.mxu0 0.0
  %1089 = vmatpush1.msra.mxu0 0.0
  %1090 = vmatprep.subr.mxu0 0.0
  %1091 = vmatpush1.msra.mxu0 0.0
  %1092 = vmatprep.subr.mxu0 0.0
  %1093 = vmatpush1.msra.mxu0 %v1064
  %1094 = vmatprep.subr.mxu0 0.0
  %1095 = vmatpush1.msra.mxu0 %v61
  %1096 = vmatprep.subr.mxu0 0.0
  %1097 = vmatpush1.msra.mxu0 %v60
  %1098 = vmatprep.subr.mxu0 0.0
  %1099 = vmatpush2.msra.mxu0 0.0
  %1100 = vmatprep.subr.mxu0 0.0
  %1101 = vmatpush2.msra.mxu0 0.0
  %1102 = vmatprep.subr.mxu0 0.0
  %1103 = vmatpush2.msra.mxu0 0.0
  %1104 = vmatprep.subr.mxu0 0.0
  %1105 = vmatpush2.msra.mxu0 0.0
  %1106 = vmatprep.subr.mxu0 0.0
  %1107 = vmatpush2.msra.mxu0 0.0
  %1108 = vmatprep.subr.mxu0 0.0
  %1109 = vmatpush2.msra.mxu0 0.0
  %1110 = vmatprep.subr.mxu0 0.0
  %1111 = vmatpush2.msra.mxu0 0.0
  %1112 = vmatprep.subr.mxu0 0.0
  %1113 = vmatpush2.msra.mxu0 0.0
  %1114 = vmatprep.subr.mxu0 0.0
  %1115 = vmatpush2.msra.mxu0 0.0
  %1116 = vmatprep.subr.mxu0 0.0
  %1117 = vmatpush2.msra.mxu0 0.0
  %1118 = vmatprep.subr.mxu0 0.0
  %1119 = vmatpush2.msra.mxu0 0.0
  %1120 = vmatprep.subr.mxu0 0.0
  %1121 = vmatpush2.msra.mxu0 0.0
  %1122 = vmatprep.subr.mxu0 0.0
  %1123 = vmatpush2.msra.mxu0 0.0
  %1124 = vmatprep.subr.mxu0 0.0
  %1125 = vmatpush2.msra.mxu0 0.0
  %1126 = vmatprep.subr.mxu0 0.0
  %1127 = vmatpush2.msra.mxu0 0.0
  %1128 = vmatprep.subr.mxu0 0.0
  %1129 = vmatpush2.msra.mxu0 0.0
  %1130 = vmatprep.mubr.f32.mxu0 0.0
  %1131 = vmatmul.mubr.f32.gmra.mxu0 %v1058
  %v1132 = vpop.f32.mrf.mxu0
  %v1133 = vadd.f32 0.0, %v1132
  %v1134 = vpop.f32.mrf.mxu0
  %1135 = vmatprep.mubr.f32.mxu0 0.0
  %1136 = vmatmul.mubr.f32.gmra.mxu0 %v1061
  %v1137 = vpop.f32.mrf.mxu0
  %v1138 = vadd.f32 0.0, %v1137
  %v1139 = vpop.f32.mrf.mxu0
  %1140 = vdwg.mxu0
  %v1142 = vsel %vm827, %v901, 0
  %v1145 = vsel %vm827, %v903, 0
  %v1148 = vsel %vm978, %v65, 0
  %1150 = vmatprep.subr.mxu0 0.0
  %1151 = vmatpush1.msra.mxu0 0.0
  %1152 = vmatprep.subr.mxu0 0.0
  %1153 = vmatpush1.msra.mxu0 0.0
  %1154 = vmatprep.subr.mxu0 0.0
  %1155 = vmatpush1.msra.mxu0 0.0
  %1156 = vmatprep.subr.mxu0 0.0
  %1157 = vmatpush1.msra.mxu0 0.0
  %1158 = vmatprep.subr.mxu0 0.0
  %1159 = vmatpush1.msra.mxu0 0.0
  %1160 = vmatprep.subr.mxu0 0.0
  %1161 = vmatpush1.msra.mxu0 0.0
  %1162 = vmatprep.subr.mxu0 0.0
  %1163 = vmatpush1.msra.mxu0 0.0
  %1164 = vmatprep.subr.mxu0 0.0
  %1165 = vmatpush1.msra.mxu0 0.0
  %1166 = vmatprep.subr.mxu0 0.0
  %1167 = vmatpush1.msra.mxu0 0.0
  %1168 = vmatprep.subr.mxu0 0.0
  %1169 = vmatpush1.msra.mxu0 0.0
  %1170 = vmatprep.subr.mxu0 0.0
  %1171 = vmatpush1.msra.mxu0 0.0
  %1172 = vmatprep.subr.mxu0 0.0
  %1173 = vmatpush1.msra.mxu0 0.0
  %1174 = vmatprep.subr.mxu0 0.0
  %1175 = vmatpush1.msra.mxu0 0.0
  %1176 = vmatprep.subr.mxu0 0.0
  %1177 = vmatpush1.msra.mxu0 %v1148
  %1178 = vmatprep.subr.mxu0 0.0
  %1179 = vmatpush1.msra.mxu0 %v64
  %1180 = vmatprep.subr.mxu0 0.0
  %1181 = vmatpush1.msra.mxu0 %v63
  %1182 = vmatprep.subr.mxu0 0.0
  %1183 = vmatpush2.msra.mxu0 0.0
  %1184 = vmatprep.subr.mxu0 0.0
  %1185 = vmatpush2.msra.mxu0 0.0
  %1186 = vmatprep.subr.mxu0 0.0
  %1187 = vmatpush2.msra.mxu0 0.0
  %1188 = vmatprep.subr.mxu0 0.0
  %1189 = vmatpush2.msra.mxu0 0.0
  %1190 = vmatprep.subr.mxu0 0.0
  %1191 = vmatpush2.msra.mxu0 0.0
  %1192 = vmatprep.subr.mxu0 0.0
  %1193 = vmatpush2.msra.mxu0 0.0
  %1194 = vmatprep.subr.mxu0 0.0
  %1195 = vmatpush2.msra.mxu0 0.0
  %1196 = vmatprep.subr.mxu0 0.0
  %1197 = vmatpush2.msra.mxu0 0.0
  %1198 = vmatprep.subr.mxu0 0.0
  %1199 = vmatpush2.msra.mxu0 0.0
  %1200 = vmatprep.subr.mxu0 0.0
  %1201 = vmatpush2.msra.mxu0 0.0
  %1202 = vmatprep.subr.mxu0 0.0
  %1203 = vmatpush2.msra.mxu0 0.0
  %1204 = vmatprep.subr.mxu0 0.0
  %1205 = vmatpush2.msra.mxu0 0.0
  %1206 = vmatprep.subr.mxu0 0.0
  %1207 = vmatpush2.msra.mxu0 0.0
  %1208 = vmatprep.subr.mxu0 0.0
  %1209 = vmatpush2.msra.mxu0 0.0
  %1210 = vmatprep.subr.mxu0 0.0
  %1211 = vmatpush2.msra.mxu0 0.0
  %1212 = vmatprep.subr.mxu0 0.0
  %1213 = vmatpush2.msra.mxu0 0.0
  %1214 = vmatprep.mubr.f32.mxu0 0.0
  %1215 = vmatmul.mubr.f32.gmra.mxu0 %v1142
  %v1216 = vpop.f32.mrf.mxu0
  %v1217 = vadd.f32 0.0, %v1216
  %v1218 = vpop.f32.mrf.mxu0
  %1219 = vmatprep.mubr.f32.mxu0 0.0
  %1220 = vmatmul.mubr.f32.gmra.mxu0 %v1145
  %v1221 = vpop.f32.mrf.mxu0
  %v1222 = vadd.f32 0.0, %v1221
  %v1223 = vpop.f32.mrf.mxu0
  %1224 = vdwg.mxu0
  %v1226 = vsel %vm827, %v905, 0
  %v1229 = vsel %vm827, %v907, 0
  %v1232 = vsel %vm978, %v68, 0
  %1234 = vmatprep.subr.mxu0 0.0
  %1235 = vmatpush1.msra.mxu0 0.0
  %1236 = vmatprep.subr.mxu0 0.0
  %1237 = vmatpush1.msra.mxu0 0.0
  %1238 = vmatprep.subr.mxu0 0.0
  %1239 = vmatpush1.msra.mxu0 0.0
  %1240 = vmatprep.subr.mxu0 0.0
  %1241 = vmatpush1.msra.mxu0 0.0
  %1242 = vmatprep.subr.mxu0 0.0
  %1243 = vmatpush1.msra.mxu0 0.0
  %1244 = vmatprep.subr.mxu0 0.0
  %1245 = vmatpush1.msra.mxu0 0.0
  %1246 = vmatprep.subr.mxu0 0.0
  %1247 = vmatpush1.msra.mxu0 0.0
  %1248 = vmatprep.subr.mxu0 0.0
  %1249 = vmatpush1.msra.mxu0 0.0
  %1250 = vmatprep.subr.mxu0 0.0
  %1251 = vmatpush1.msra.mxu0 0.0
  %1252 = vmatprep.subr.mxu0 0.0
  %1253 = vmatpush1.msra.mxu0 0.0
  %1254 = vmatprep.subr.mxu0 0.0
  %1255 = vmatpush1.msra.mxu0 0.0
  %1256 = vmatprep.subr.mxu0 0.0
  %1257 = vmatpush1.msra.mxu0 0.0
  %1258 = vmatprep.subr.mxu0 0.0
  %1259 = vmatpush1.msra.mxu0 0.0
  %1260 = vmatprep.subr.mxu0 0.0
  %1261 = vmatpush1.msra.mxu0 %v1232
  %1262 = vmatprep.subr.mxu0 0.0
  %1263 = vmatpush1.msra.mxu0 %v67
  %1264 = vmatprep.subr.mxu0 0.0
  %1265 = vmatpush1.msra.mxu0 %v66
  %1266 = vmatprep.subr.mxu0 0.0
  %1267 = vmatpush2.msra.mxu0 0.0
  %1268 = vmatprep.subr.mxu0 0.0
  %1269 = vmatpush2.msra.mxu0 0.0
  %1270 = vmatprep.subr.mxu0 0.0
  %1271 = vmatpush2.msra.mxu0 0.0
  %1272 = vmatprep.subr.mxu0 0.0
  %1273 = vmatpush2.msra.mxu0 0.0
  %1274 = vmatprep.subr.mxu0 0.0
  %1275 = vmatpush2.msra.mxu0 0.0
  %1276 = vmatprep.subr.mxu0 0.0
  %1277 = vmatpush2.msra.mxu0 0.0
  %1278 = vmatprep.subr.mxu0 0.0
  %1279 = vmatpush2.msra.mxu0 0.0
  %1280 = vmatprep.subr.mxu0 0.0
  %1281 = vmatpush2.msra.mxu0 0.0
  %1282 = vmatprep.subr.mxu0 0.0
  %1283 = vmatpush2.msra.mxu0 0.0
  %1284 = vmatprep.subr.mxu0 0.0
  %1285 = vmatpush2.msra.mxu0 0.0
  %1286 = vmatprep.subr.mxu0 0.0
  %1287 = vmatpush2.msra.mxu0 0.0
  %1288 = vmatprep.subr.mxu0 0.0
  %1289 = vmatpush2.msra.mxu0 0.0
  %1290 = vmatprep.subr.mxu0 0.0
  %1291 = vmatpush2.msra.mxu0 0.0
  %1292 = vmatprep.subr.mxu0 0.0
  %1293 = vmatpush2.msra.mxu0 0.0
  %1294 = vmatprep.subr.mxu0 0.0
  %1295 = vmatpush2.msra.mxu0 0.0
  %1296 = vmatprep.subr.mxu0 0.0
  %1297 = vmatpush2.msra.mxu0 0.0
  %1298 = vmatprep.mubr.f32.mxu0 0.0
  %1299 = vmatmul.mubr.f32.gmra.mxu0 %v1226
  %v1300 = vpop.f32.mrf.mxu0
  %v1301 = vadd.f32 0.0, %v1300
  %v1302 = vpop.f32.mrf.mxu0
  %1303 = vmatprep.mubr.f32.mxu0 0.0
  %1304 = vmatmul.mubr.f32.gmra.mxu0 %v1229
  %v1305 = vpop.f32.mrf.mxu0
  %v1306 = vadd.f32 0.0, %v1305
  %v1307 = vpop.f32.mrf.mxu0
  %1308 = vdwg.mxu0
  %v1310 = vsel %vm827, %v909, 0
  %v1313 = vsel %vm827, %v911, 0
  %v1316 = vsel %vm978, %v71, 0
  %1318 = vmatprep.subr.mxu0 0.0
  %1319 = vmatpush1.msra.mxu0 0.0
  %1320 = vmatprep.subr.mxu0 0.0
  %1321 = vmatpush1.msra.mxu0 0.0
  %1322 = vmatprep.subr.mxu0 0.0
  %1323 = vmatpush1.msra.mxu0 0.0
  %1324 = vmatprep.subr.mxu0 0.0
  %1325 = vmatpush1.msra.mxu0 0.0
  %1326 = vmatprep.subr.mxu0 0.0
  %1327 = vmatpush1.msra.mxu0 0.0
  %1328 = vmatprep.subr.mxu0 0.0
  %1329 = vmatpush1.msra.mxu0 0.0
  %1330 = vmatprep.subr.mxu0 0.0
  %1331 = vmatpush1.msra.mxu0 0.0
  %1332 = vmatprep.subr.mxu0 0.0
  %1333 = vmatpush1.msra.mxu0 0.0
  %1334 = vmatprep.subr.mxu0 0.0
  %1335 = vmatpush1.msra.mxu0 0.0
  %1336 = vmatprep.subr.mxu0 0.0
  %1337 = vmatpush1.msra.mxu0 0.0
  %1338 = vmatprep.subr.mxu0 0.0
  %1339 = vmatpush1.msra.mxu0 0.0
  %1340 = vmatprep.subr.mxu0 0.0
  %1341 = vmatpush1.msra.mxu0 0.0
  %1342 = vmatprep.subr.mxu0 0.0
  %1343 = vmatpush1.msra.mxu0 0.0
  %1344 = vmatprep.subr.mxu0 0.0
  %1345 = vmatpush1.msra.mxu0 %v1316
  %1346 = vmatprep.subr.mxu0 0.0
  %1347 = vmatpush1.msra.mxu0 %v70
  %1348 = vmatprep.subr.mxu0 0.0
  %1349 = vmatpush1.msra.mxu0 %v69
  %1350 = vmatprep.subr.mxu0 0.0
  %1351 = vmatpush2.msra.mxu0 0.0
  %1352 = vmatprep.subr.mxu0 0.0
  %1353 = vmatpush2.msra.mxu0 0.0
  %1354 = vmatprep.subr.mxu0 0.0
  %1355 = vmatpush2.msra.mxu0 0.0
  %1356 = vmatprep.subr.mxu0 0.0
  %1357 = vmatpush2.msra.mxu0 0.0
  %1358 = vmatprep.subr.mxu0 0.0
  %1359 = vmatpush2.msra.mxu0 0.0
  %1360 = vmatprep.subr.mxu0 0.0
  %1361 = vmatpush2.msra.mxu0 0.0
  %1362 = vmatprep.subr.mxu0 0.0
  %1363 = vmatpush2.msra.mxu0 0.0
  %1364 = vmatprep.subr.mxu0 0.0
  %1365 = vmatpush2.msra.mxu0 0.0
  %1366 = vmatprep.subr.mxu0 0.0
  %1367 = vmatpush2.msra.mxu0 0.0
  %1368 = vmatprep.subr.mxu0 0.0
  %1369 = vmatpush2.msra.mxu0 0.0
  %1370 = vmatprep.subr.mxu0 0.0
  %1371 = vmatpush2.msra.mxu0 0.0
  %1372 = vmatprep.subr.mxu0 0.0
  %1373 = vmatpush2.msra.mxu0 0.0
  %1374 = vmatprep.subr.mxu0 0.0
  %1375 = vmatpush2.msra.mxu0 0.0
  %1376 = vmatprep.subr.mxu0 0.0
  %1377 = vmatpush2.msra.mxu0 0.0
  %1378 = vmatprep.subr.mxu0 0.0
  %1379 = vmatpush2.msra.mxu0 0.0
  %1380 = vmatprep.subr.mxu0 0.0
  %1381 = vmatpush2.msra.mxu0 0.0
  %1382 = vmatprep.mubr.f32.mxu0 0.0
  %1383 = vmatmul.mubr.f32.gmra.mxu0 %v1310
  %v1384 = vpop.f32.mrf.mxu0
  %v1385 = vadd.f32 0.0, %v1384
  %v1386 = vpop.f32.mrf.mxu0
  %1387 = vmatprep.mubr.f32.mxu0 0.0
  %1388 = vmatmul.mubr.f32.gmra.mxu0 %v1313
  %v1389 = vpop.f32.mrf.mxu0
  %v1390 = vadd.f32 0.0, %v1389
  %v1391 = vpop.f32.mrf.mxu0
  %1392 = vdwg.mxu0
  %v1394 = vsel %vm827, %v913, 0
  %v1397 = vsel %vm827, %v915, 0
  %v1400 = vsel %vm978, %v74, 0
  %1402 = vmatprep.subr.mxu0 0.0
  %1403 = vmatpush1.msra.mxu0 0.0
  %1404 = vmatprep.subr.mxu0 0.0
  %1405 = vmatpush1.msra.mxu0 0.0
  %1406 = vmatprep.subr.mxu0 0.0
  %1407 = vmatpush1.msra.mxu0 0.0
  %1408 = vmatprep.subr.mxu0 0.0
  %1409 = vmatpush1.msra.mxu0 0.0
  %1410 = vmatprep.subr.mxu0 0.0
  %1411 = vmatpush1.msra.mxu0 0.0
  %1412 = vmatprep.subr.mxu0 0.0
  %1413 = vmatpush1.msra.mxu0 0.0
  %1414 = vmatprep.subr.mxu0 0.0
  %1415 = vmatpush1.msra.mxu0 0.0
  %1416 = vmatprep.subr.mxu0 0.0
  %1417 = vmatpush1.msra.mxu0 0.0
  %1418 = vmatprep.subr.mxu0 0.0
  %1419 = vmatpush1.msra.mxu0 0.0
  %1420 = vmatprep.subr.mxu0 0.0
  %1421 = vmatpush1.msra.mxu0 0.0
  %1422 = vmatprep.subr.mxu0 0.0
  %1423 = vmatpush1.msra.mxu0 0.0
  %1424 = vmatprep.subr.mxu0 0.0
  %1425 = vmatpush1.msra.mxu0 0.0
  %1426 = vmatprep.subr.mxu0 0.0
  %1427 = vmatpush1.msra.mxu0 0.0
  %1428 = vmatprep.subr.mxu0 0.0
  %1429 = vmatpush1.msra.mxu0 %v1400
  %1430 = vmatprep.subr.mxu0 0.0
  %1431 = vmatpush1.msra.mxu0 %v73
  %1432 = vmatprep.subr.mxu0 0.0
  %1433 = vmatpush1.msra.mxu0 %v72
  %1434 = vmatprep.subr.mxu0 0.0
  %1435 = vmatpush2.msra.mxu0 0.0
  %1436 = vmatprep.subr.mxu0 0.0
  %1437 = vmatpush2.msra.mxu0 0.0
  %1438 = vmatprep.subr.mxu0 0.0
  %1439 = vmatpush2.msra.mxu0 0.0
  %1440 = vmatprep.subr.mxu0 0.0
  %1441 = vmatpush2.msra.mxu0 0.0
  %1442 = vmatprep.subr.mxu0 0.0
  %1443 = vmatpush2.msra.mxu0 0.0
  %1444 = vmatprep.subr.mxu0 0.0
  %1445 = vmatpush2.msra.mxu0 0.0
  %1446 = vmatprep.subr.mxu0 0.0
  %1447 = vmatpush2.msra.mxu0 0.0
  %1448 = vmatprep.subr.mxu0 0.0
  %1449 = vmatpush2.msra.mxu0 0.0
  %1450 = vmatprep.subr.mxu0 0.0
  %1451 = vmatpush2.msra.mxu0 0.0
  %1452 = vmatprep.subr.mxu0 0.0
  %1453 = vmatpush2.msra.mxu0 0.0
  %1454 = vmatprep.subr.mxu0 0.0
  %1455 = vmatpush2.msra.mxu0 0.0
  %1456 = vmatprep.subr.mxu0 0.0
  %1457 = vmatpush2.msra.mxu0 0.0
  %1458 = vmatprep.subr.mxu0 0.0
  %1459 = vmatpush2.msra.mxu0 0.0
  %1460 = vmatprep.subr.mxu0 0.0
  %1461 = vmatpush2.msra.mxu0 0.0
  %1462 = vmatprep.subr.mxu0 0.0
  %1463 = vmatpush2.msra.mxu0 0.0
  %1464 = vmatprep.subr.mxu0 0.0
  %1465 = vmatpush2.msra.mxu0 0.0
  %1466 = vmatprep.mubr.f32.mxu0 0.0
  %1467 = vmatmul.mubr.f32.gmra.mxu0 %v1394
  %v1468 = vpop.f32.mrf.mxu0
  %v1469 = vadd.f32 0.0, %v1468
  %v1470 = vpop.f32.mrf.mxu0
  %1471 = vmatprep.mubr.f32.mxu0 0.0
  %1472 = vmatmul.mubr.f32.gmra.mxu0 %v1397
  %v1473 = vpop.f32.mrf.mxu0
  %v1474 = vadd.f32 0.0, %v1473
  %v1475 = vpop.f32.mrf.mxu0
  %1476 = vdwg.mxu0
  %v1478 = vsel %vm827, %v917, 0
  %v1481 = vsel %vm827, %v919, 0
  %v1484 = vsel %vm978, %v77, 0
  %1486 = vmatprep.subr.mxu0 0.0
  %1487 = vmatpush1.msra.mxu0 0.0
  %1488 = vmatprep.subr.mxu0 0.0
  %1489 = vmatpush1.msra.mxu0 0.0
  %1490 = vmatprep.subr.mxu0 0.0
  %1491 = vmatpush1.msra.mxu0 0.0
  %1492 = vmatprep.subr.mxu0 0.0
  %1493 = vmatpush1.msra.mxu0 0.0
  %1494 = vmatprep.subr.mxu0 0.0
  %1495 = vmatpush1.msra.mxu0 0.0
  %1496 = vmatprep.subr.mxu0 0.0
  %1497 = vmatpush1.msra.mxu0 0.0
  %1498 = vmatprep.subr.mxu0 0.0
  %1499 = vmatpush1.msra.mxu0 0.0
  %1500 = vmatprep.subr.mxu0 0.0
  %1501 = vmatpush1.msra.mxu0 0.0
  %1502 = vmatprep.subr.mxu0 0.0
  %1503 = vmatpush1.msra.mxu0 0.0
  %1504 = vmatprep.subr.mxu0 0.0
  %1505 = vmatpush1.msra.mxu0 0.0
  %1506 = vmatprep.subr.mxu0 0.0
  %1507 = vmatpush1.msra.mxu0 0.0
  %1508 = vmatprep.subr.mxu0 0.0
  %1509 = vmatpush1.msra.mxu0 0.0
  %1510 = vmatprep.subr.mxu0 0.0
  %1511 = vmatpush1.msra.mxu0 0.0
  %1512 = vmatprep.subr.mxu0 0.0
  %1513 = vmatpush1.msra.mxu0 %v1484
  %1514 = vmatprep.subr.mxu0 0.0
  %1515 = vmatpush1.msra.mxu0 %v76
  %1516 = vmatprep.subr.mxu0 0.0
  %1517 = vmatpush1.msra.mxu0 %v75
  %1518 = vmatprep.subr.mxu0 0.0
  %1519 = vmatpush2.msra.mxu0 0.0
  %1520 = vmatprep.subr.mxu0 0.0
  %1521 = vmatpush2.msra.mxu0 0.0
  %1522 = vmatprep.subr.mxu0 0.0
  %1523 = vmatpush2.msra.mxu0 0.0
  %1524 = vmatprep.subr.mxu0 0.0
  %1525 = vmatpush2.msra.mxu0 0.0
  %1526 = vmatprep.subr.mxu0 0.0
  %1527 = vmatpush2.msra.mxu0 0.0
  %1528 = vmatprep.subr.mxu0 0.0
  %1529 = vmatpush2.msra.mxu0 0.0
  %1530 = vmatprep.subr.mxu0 0.0
  %1531 = vmatpush2.msra.mxu0 0.0
  %1532 = vmatprep.subr.mxu0 0.0
  %1533 = vmatpush2.msra.mxu0 0.0
  %1534 = vmatprep.subr.mxu0 0.0
  %1535 = vmatpush2.msra.mxu0 0.0
  %1536 = vmatprep.subr.mxu0 0.0
  %1537 = vmatpush2.msra.mxu0 0.0
  %1538 = vmatprep.subr.mxu0 0.0
  %1539 = vmatpush2.msra.mxu0 0.0
  %1540 = vmatprep.subr.mxu0 0.0
  %1541 = vmatpush2.msra.mxu0 0.0
  %1542 = vmatprep.subr.mxu0 0.0
  %1543 = vmatpush2.msra.mxu0 0.0
  %1544 = vmatprep.subr.mxu0 0.0
  %1545 = vmatpush2.msra.mxu0 0.0
  %1546 = vmatprep.subr.mxu0 0.0
  %1547 = vmatpush2.msra.mxu0 0.0
  %1548 = vmatprep.subr.mxu0 0.0
  %1549 = vmatpush2.msra.mxu0 0.0
  %1550 = vmatprep.mubr.f32.mxu0 0.0
  %1551 = vmatmul.mubr.f32.gmra.mxu0 %v1478
  %v1552 = vpop.f32.mrf.mxu0
  %v1553 = vadd.f32 0.0, %v1552
  %v1554 = vpop.f32.mrf.mxu0
  %1555 = vmatprep.mubr.f32.mxu0 0.0
  %1556 = vmatmul.mubr.f32.gmra.mxu0 %v1481
  %v1557 = vpop.f32.mrf.mxu0
  %v1558 = vadd.f32 0.0, %v1557
  %v1559 = vpop.f32.mrf.mxu0
  %1560 = vdwg.mxu0
  %v1562 = vsel %vm827, %v921, 0
  %v1565 = vsel %vm827, %v923, 0
  %v1568 = vsel %vm978, %v80, 0
  %1570 = vmatprep.subr.mxu0 0.0
  %1571 = vmatpush1.msra.mxu0 0.0
  %1572 = vmatprep.subr.mxu0 0.0
  %1573 = vmatpush1.msra.mxu0 0.0
  %1574 = vmatprep.subr.mxu0 0.0
  %1575 = vmatpush1.msra.mxu0 0.0
  %1576 = vmatprep.subr.mxu0 0.0
  %1577 = vmatpush1.msra.mxu0 0.0
  %1578 = vmatprep.subr.mxu0 0.0
  %1579 = vmatpush1.msra.mxu0 0.0
  %1580 = vmatprep.subr.mxu0 0.0
  %1581 = vmatpush1.msra.mxu0 0.0
  %1582 = vmatprep.subr.mxu0 0.0
  %1583 = vmatpush1.msra.mxu0 0.0
  %1584 = vmatprep.subr.mxu0 0.0
  %1585 = vmatpush1.msra.mxu0 0.0
  %1586 = vmatprep.subr.mxu0 0.0
  %1587 = vmatpush1.msra.mxu0 0.0
  %1588 = vmatprep.subr.mxu0 0.0
  %1589 = vmatpush1.msra.mxu0 0.0
  %1590 = vmatprep.subr.mxu0 0.0
  %1591 = vmatpush1.msra.mxu0 0.0
  %1592 = vmatprep.subr.mxu0 0.0
  %1593 = vmatpush1.msra.mxu0 0.0
  %1594 = vmatprep.subr.mxu0 0.0
  %1595 = vmatpush1.msra.mxu0 0.0
  %1596 = vmatprep.subr.mxu0 0.0
  %1597 = vmatpush1.msra.mxu0 %v1568
  %1598 = vmatprep.subr.mxu0 0.0
  %1599 = vmatpush1.msra.mxu0 %v79
  %1600 = vmatprep.subr.mxu0 0.0
  %1601 = vmatpush1.msra.mxu0 %v78
  %1602 = vmatprep.subr.mxu0 0.0
  %1603 = vmatpush2.msra.mxu0 0.0
  %1604 = vmatprep.subr.mxu0 0.0
  %1605 = vmatpush2.msra.mxu0 0.0
  %1606 = vmatprep.subr.mxu0 0.0
  %1607 = vmatpush2.msra.mxu0 0.0
  %1608 = vmatprep.subr.mxu0 0.0
  %1609 = vmatpush2.msra.mxu0 0.0
  %1610 = vmatprep.subr.mxu0 0.0
  %1611 = vmatpush2.msra.mxu0 0.0
  %1612 = vmatprep.subr.mxu0 0.0
  %1613 = vmatpush2.msra.mxu0 0.0
  %1614 = vmatprep.subr.mxu0 0.0
  %1615 = vmatpush2.msra.mxu0 0.0
  %1616 = vmatprep.subr.mxu0 0.0
  %1617 = vmatpush2.msra.mxu0 0.0
  %1618 = vmatprep.subr.mxu0 0.0
  %1619 = vmatpush2.msra.mxu0 0.0
  %1620 = vmatprep.subr.mxu0 0.0
  %1621 = vmatpush2.msra.mxu0 0.0
  %1622 = vmatprep.subr.mxu0 0.0
  %1623 = vmatpush2.msra.mxu0 0.0
  %1624 = vmatprep.subr.mxu0 0.0
  %1625 = vmatpush2.msra.mxu0 0.0
  %1626 = vmatprep.subr.mxu0 0.0
  %1627 = vmatpush2.msra.mxu0 0.0
  %1628 = vmatprep.subr.mxu0 0.0
  %1629 = vmatpush2.msra.mxu0 0.0
  %1630 = vmatprep.subr.mxu0 0.0
  %1631 = vmatpush2.msra.mxu0 0.0
  %1632 = vmatprep.subr.mxu0 0.0
  %1633 = vmatpush2.msra.mxu0 0.0
  %1634 = vmatprep.mubr.f32.mxu0 0.0
  %1635 = vmatmul.mubr.f32.gmra.mxu0 %v1562
  %v1636 = vpop.f32.mrf.mxu0
  %v1637 = vadd.f32 0.0, %v1636
  %v1638 = vpop.f32.mrf.mxu0
  %1639 = vmatprep.mubr.f32.mxu0 0.0
  %1640 = vmatmul.mubr.f32.gmra.mxu0 %v1565
  %v1641 = vpop.f32.mrf.mxu0
  %v1642 = vadd.f32 0.0, %v1641
  %v1643 = vpop.f32.mrf.mxu0
  %1644 = vdwg.mxu0
  %v1645 = vrcp.pop %v926
  %v1646 = vmul.f32 %v1049, %v1645
  %v1647 = vrcp.pop %v929
  %v1648 = vmul.f32 %v1054, %v1647
  %v1649 = vrcp.pop %v932
  %v1650 = vmul.f32 %v1133, %v1649
  %v1651 = vrcp.pop %v935
  %v1652 = vmul.f32 %v1138, %v1651
  %v1653 = vrcp.pop %v938
  %v1654 = vmul.f32 %v1217, %v1653
  %v1655 = vrcp.pop %v941
  %v1656 = vmul.f32 %v1222, %v1655
  %v1657 = vrcp.pop %v944
  %v1658 = vmul.f32 %v1301, %v1657
  %v1659 = vrcp.pop %v947
  %v1660 = vmul.f32 %v1306, %v1659
  %v1661 = vrcp.pop %v950
  %v1662 = vmul.f32 %v1385, %v1661
  %v1663 = vrcp.pop %v953
  %v1664 = vmul.f32 %v1390, %v1663
  %v1665 = vrcp.pop %v956
  %v1666 = vmul.f32 %v1469, %v1665
  %v1667 = vrcp.pop %v959
  %v1668 = vmul.f32 %v1474, %v1667
  %v1669 = vrcp.pop %v962
  %v1670 = vmul.f32 %v1553, %v1669
  %v1671 = vrcp.pop %v965
  %v1672 = vmul.f32 %v1558, %v1671
  %v1673 = vrcp.pop %v968
  %v1674 = vmul.f32 %v1637, %v1673
  %v1675 = vrcp.pop %v971
  %v1676 = vmul.f32 %v1642, %v1675
  %1677 = vst.msk [vmem:[%s4] sm:$0xff] %vm82, %v1646
  %1678 = vst.msk [vmem:[%s4 + $0x8] sm:$0xff] %vm82, %v1648
  %1679 = vst.msk [vmem:[%s4 + $0x10] sm:$0xff] %vm82, %v1650
  %1680 = vst.msk [vmem:[%s4 + $0x18] sm:$0xff] %vm82, %v1652
  %1681 = vst.msk [vmem:[%s4 + $0x20] sm:$0xff] %vm82, %v1654
  %1682 = vst.msk [vmem:[%s4 + $0x28] sm:$0xff] %vm82, %v1656
  %1683 = vst.msk [vmem:[%s4 + $0x30] sm:$0xff] %vm82, %v1658
  %1684 = vst.msk [vmem:[%s4 + $0x38] sm:$0xff] %vm82, %v1660
  %1685 = vst.msk [vmem:[%s4 + $0x40] sm:$0xff] %vm82, %v1662
  %1686 = vst.msk [vmem:[%s4 + $0x48] sm:$0xff] %vm82, %v1664
  %1687 = vst.msk [vmem:[%s4 + $0x50] sm:$0xff] %vm82, %v1666
  %1688 = vst.msk [vmem:[%s4 + $0x58] sm:$0xff] %vm82, %v1668
  %1689 = vst.msk [vmem:[%s4 + $0x60] sm:$0xff] %vm82, %v1670
  %1690 = vst.msk [vmem:[%s4 + $0x68] sm:$0xff] %vm82, %v1672
  %1691 = vst.msk [vmem:[%s4 + $0x70] sm:$0xff] %vm82, %v1674
  %1692 = vst.msk [vmem:[%s4 + $0x78] sm:$0xff] %vm82, %v1676
  // Predicated region
  $region18: #{tpu_custom_call.1} parent=0 // pred_check
    _
  $region19: #{tpu_custom_call.1} parent=0 // pred_check_branch
    %1694 = sbr.rel (0) target = $region21
  $region20: #{tpu_custom_call.1} parent=0 // pred_region
    _
  $region21: #{tpu_custom_call.1} parent=0 // pred_fallthru
    _
  // Predicated region
  $region22: #{tpu_custom_call.1} parent=0 // pred_check
    _
  $region23: #{tpu_custom_call.1} parent=0 // pred_check_branch
    %1696 = sbr.rel (0) target = $region25
  $region24: #{tpu_custom_call.1} parent=0 // pred_region
    _
  $region25: #{tpu_custom_call.1} parent=0 // pred_fallthru
    _

</llo_original>
